<compile_context>
chip_gen: v7x
topology: tpu7x:2x2x1
jax: 0.10.0
libtpu: 0.0.40
codegen_flags: <defaults>
</compile_context>

<pallas_src>
import functools

import jax
import jax.numpy as jnp
from jax.experimental import pallas as pl
from jax.experimental.pallas import tpu as pltpu


class ForwardMode:
    TRAIN = 0
    SUPERVISED_VAL = 1
    UNSUPERVISED_VAL = 2


def _round_up(x: int, m: int) -> int:
    return ((x + m - 1) // m) * m


def _num_tensorcores() -> int:
    """Best-effort TensorCores-per-device count (v5e/v6e: 1, v7x: 2)."""
    try:
        dev = jax.devices()[0]
        nc = getattr(dev, "num_cores", None)
        if isinstance(nc, int) and nc > 0:
            return nc
        kind = str(getattr(dev, "device_kind", "")).lower()
        if "v7" in kind:
            return 2
    except Exception:
        pass
    return 1


def _choose_tile_n(n: int, num_cores: int, row_mult: int) -> int:
    """Row-tile size: one grid step for small/moderate N on 1-TC chips, >=
    num_cores steps on multi-TC chips, tiles capped at 1024 rows (~3 MiB
    double-buffered per tile — fits every generation's VMEM)."""
    if num_cores <= 1 and n <= 1024:
        return max(row_mult, _round_up(n, row_mult))
    per_core = pl.cdiv(n, max(num_cores, 1))
    return max(row_mult, min(1024, _round_up(per_core, row_mult)))


# --------------------------------------------------------------------------
# Pallas kernel: fused discovery head (forward_heads_single_view)
# --------------------------------------------------------------------------
def _discovery_head_kernel(
    x_ref,        # (TN, feat_dim)     bf16 (or f32) box-feature tile
    wcat_ref,     # (feat_dim, H+L)    bf16 fused [hidden | classifier] weight
    bcat_ref,     # (1, H+L)           f32 fused bias
    w2_ref,       # (H, P+Upad)        bf16 fused [projection | projection@protos]
    b2_ref,       # (1, P+Upad)        f32 fused bias
    o_ref,        # (TN, L+Upad)       output logits tile
    *,
    hidden_dim: int,
    proj_dim: int,
    inv_temperature: float,
):
    # bf16 MXU operands, f32 accumulation.  No-op cast when input is bf16.
    x = x_ref[...].astype(jnp.bfloat16)

    # Matmul 1: one wide matmul covering the MLP hidden layer (first H cols,
    # 128-lane aligned) and the supervised classifier (last L cols).
    ch = jnp.dot(x, wcat_ref[...], preferred_element_type=jnp.float32) + bcat_ref[...]
    h = jnp.maximum(ch[:, :hidden_dim], 0.0)        # ReLU, lane-aligned slice
    labeled = ch[:, hidden_dim:]

    # Matmul 2: fused [projection | projection @ normalized-prototypes].
    zw = (
        jnp.dot(h.astype(jnp.bfloat16), w2_ref[...],
                preferred_element_type=jnp.float32)
        + b2_ref[...]
    )
    z = zw[:, :proj_dim]          # projection output (only needed for its norm)
    raw = zw[:, proj_dim:]        # un-normalized unlabeled logits

    # Deferred L2 normalization fused with the temperature: row scaling
    # commutes with the prototype matmul, so scale the (smaller) result.
    sq = jnp.sum(z * z, axis=-1, keepdims=True)
    scale = inv_temperature * jax.lax.rsqrt(sq + 1e-12)
    unlabeled = raw * scale

    # Single lane-dense store of the full [L+Upad]-wide logits block.
    o_ref[...] = jnp.concatenate([labeled, unlabeled], axis=-1).astype(o_ref.dtype)


def discovery_forward_heads_single_view(
    box_feats, w_cat, b_cat, w2, b2, *,
    num_labeled, num_unlabeled, hidden_dim, proj_dim, temperature,
    tile_n=None, out_dtype=jnp.float32,
):
    """Runs the fused discovery head on box features [N, feat_dim]."""
    n, feat_dim = box_feats.shape
    out_dim = num_labeled + num_unlabeled
    out_dim_pad = (w_cat.shape[1] - hidden_dim) + (w2.shape[1] - proj_dim)  # L + Upad

    num_cores = _num_tensorcores()
    row_mult = 16 if box_feats.dtype == jnp.bfloat16 else 8
    if tile_n is None:
        tile_n = _choose_tile_n(n, num_cores, row_mult)

    grid_steps = pl.cdiv(n, tile_n)
    n_pad = grid_steps * tile_n
    if n_pad != n:
        # Ragged RoI counts: rows are independent; padded rows sliced off below.
        box_feats = jnp.pad(box_feats, ((0, n_pad - n), (0, 0)))

    kernel = functools.partial(
        _discovery_head_kernel,
        hidden_dim=hidden_dim,
        proj_dim=proj_dim,
        inv_temperature=float(1.0 / temperature),
    )

    full = lambda i: (0, 0)  # weights: whole-array block, resident in VMEM
    # TODO(synk): at real detector sizes (feat_dim>=1024) mark these
    #             constant-index weight specs pipeline_mode=pl.Buffered(1) to
    #             avoid pointless double-buffering of resident weights.

    # Only request per-TensorCore sharding when there is more than one TC and
    # more than one tile; otherwise stay on the plain "parallel" path.
    if num_cores >= 2 and grid_steps >= 2:
        dim_sem = (pltpu.CORE_PARALLEL,)
    else:
        dim_sem = ("parallel",)

    out = pl.pallas_call(
        kernel,
        out_shape=jax.ShapeDtypeStruct((n_pad, out_dim_pad), out_dtype),
        grid_spec=pltpu.PrefetchScalarGridSpec(
            num_scalar_prefetch=0,
            grid=(grid_steps,),
            in_specs=[
                pl.BlockSpec((tile_n, feat_dim), lambda i: (i, 0)),
                pl.BlockSpec(w_cat.shape, full),
                pl.BlockSpec(b_cat.shape, full),
                pl.BlockSpec(w2.shape, full),
                pl.BlockSpec(b2.shape, full),
            ],
            out_specs=pl.BlockSpec((tile_n, out_dim_pad), lambda i: (i, 0)),
        ),
        compiler_params=pltpu.CompilerParams(
            dimension_semantics=dim_sem,
            vmem_limit_bytes=32 * 1024 * 1024,
        ),
    )(box_feats, w_cat, b_cat, w2, b2)

    if n_pad != n:
        out = out[:n]
    if out_dim_pad != out_dim:
        out = out[:, :out_dim]
    return out


# --------------------------------------------------------------------------
# DiscoveryModel wrapper (only the UNSUPERVISED_VAL path is kernelized)
# --------------------------------------------------------------------------
class DiscoveryModelPallas:
    def __init__(self, key, *, num_labeled, num_unlabeled, feat_dim, hidden_dim,
                 proj_dim, temperature):
        ks = jax.random.split(key, 7)
        s = lambda k, shape, fan_in: (
            jax.random.normal(k, shape, jnp.float32) / jnp.sqrt(float(fan_in))
        )
        # Supervised classifier with background class already removed
        # (remove_background_from_supervised_model): [feat_dim, num_labeled].
        self.wc = s(ks[0], (feat_dim, num_labeled), feat_dim)
        self.bc = s(ks[1], (1, num_labeled), feat_dim)
        # Discovery MLP (num_hidden_layers = 1 for this synthetic config).
        self.w1 = s(ks[2], (feat_dim, hidden_dim), feat_dim)
        self.b1 = s(ks[3], (1, hidden_dim), feat_dim)
        self.wp = s(ks[4], (hidden_dim, proj_dim), hidden_dim)
        self.bp = s(ks[5], (1, proj_dim), hidden_dim)
        # Prototypes for unlabeled classes.
        self.wproto = s(ks[6], (proj_dim, num_unlabeled), proj_dim)

        self.num_labeled = num_labeled
        self.num_unlabeled = num_unlabeled
        self.hidden_dim = hidden_dim
        self.proj_dim = proj_dim
        self.temperature = temperature
        self.out_dim = num_labeled + num_unlabeled
        self._prepare_inference_params()

    def _prepare_inference_params(self):
        """One-time parameter prep: fuse W1|Wc (hidden-first, lane-aligned
        slice), L2-normalize prototypes, fuse the projection & prototype
        matmuls, pad the unlabeled columns to a 128-lane-dense output width,
        and cast matmul weights to bf16 (f32 accumulation happens in-kernel)."""
        self.w_cat = jnp.concatenate([self.w1, self.wc], axis=1).astype(jnp.bfloat16)
        self.b_cat = jnp.concatenate([self.b1, self.bc], axis=1)              # f32

        wproto_n = self.wproto * jax.lax.rsqrt(
            jnp.sum(self.wproto * self.wproto, axis=0, keepdims=True) + 1e-12
        )
        self.wproto_n = wproto_n                                              # f32 ref

        out_dim_pad = max(128, _round_up(self.out_dim, 128))
        u_pad = out_dim_pad - self.num_labeled
        if u_pad != self.num_unlabeled:
            wproto_n = jnp.pad(wproto_n, ((0, 0), (0, u_pad - self.num_unlabeled)))

        # Fused projection | projection@prototypes (products in f32, then bf16).
        self.w2 = jnp.concatenate(
            [self.wp, self.wp @ wproto_n], axis=1).astype(jnp.bfloat16)
        self.b2 = jnp.concatenate([self.bp, self.bp @ wproto_n], axis=1)      # f32

    def __call__(self, box_feats, mode):
        if mode == ForwardMode.UNSUPERVISED_VAL:
            return self.forward_unsupervis_val(box_feats)
        # TODO(synk): TRAIN / SUPERVISED_VAL require the full Faster-RCNN loss
        #             pipeline (RPN, RoI matching, Sinkhorn-Knopp, memory bank)
        #             which has no single-kernel Pallas equivalent.
        raise NotImplementedError(f"ForwardMode {mode} not kernelized")

    def forward_unsupervis_val(self, box_feats):
        return discovery_forward_heads_single_view(
            box_feats, self.w_cat, self.b_cat, self.w2, self.b2,
            num_labeled=self.num_labeled, num_unlabeled=self.num_unlabeled,
            hidden_dim=self.hidden_dim, proj_dim=self.proj_dim,
            temperature=self.temperature,
        )

    # Pure-JAX references for verification.
    def reference(self, x, mimic_kernel_dtypes=False):
        if mimic_kernel_dtypes:
            # Same arithmetic / casts / fusion as the kernel.
            xb = x.astype(jnp.bfloat16)
            ch = jnp.dot(xb, self.w_cat, preferred_element_type=jnp.float32) + self.b_cat
            h = jnp.maximum(ch[:, : self.hidden_dim], 0.0)
            labeled = ch[:, self.hidden_dim:]
            zw = jnp.dot(h.astype(jnp.bfloat16), self.w2,
                         preferred_element_type=jnp.float32) + self.b2
            z = zw[:, : self.proj_dim]
            raw = zw[:, self.proj_dim:]
            scale = (1.0 / self.temperature) * jax.lax.rsqrt(
                jnp.sum(z * z, axis=-1, keepdims=True) + 1e-12)
            out = jnp.concatenate([labeled, raw * scale], axis=-1)
            return out[:, : self.out_dim]
        # Exact f32 semantics of the original module.
        xf = x.astype(jnp.float32)
        labeled = xf @ self.wc + self.bc
        h = jnp.maximum(xf @ self.w1 + self.b1, 0.0)
        z = h @ self.wp + self.bp
        z = z / jnp.sqrt(jnp.sum(z * z, axis=-1, keepdims=True) + 1e-12)
        unlabeled = (z @ self.wproto_n) / self.temperature
        return jnp.concatenate([labeled, unlabeled], axis=-1)


if __name__ == "__main__":
    key = jax.random.PRNGKey(0)
    k_model, k_feat, k_feat2 = jax.random.split(key, 3)

    # Small synthetic config (config.*): feat_dim=256, hidden_dim=256,
    # proj_dim=128, num_labeled=64, num_unlabeled=64, temperature=0.1.
    N, FEAT, HID, PROJ, L, U = 256, 256, 256, 128, 64, 64

    model = DiscoveryModelPallas(
        k_model, num_labeled=L, num_unlabeled=U, feat_dim=FEAT,
        hidden_dim=HID, proj_dim=PROJ, temperature=0.1,
    )

    # Box features as produced by supervised_model.get_box_features(...)[0];
    # the frozen detector emits them in bf16 (producer-side cast), so the
    # kernel's input stream is already half-width.
    box_feats = jax.random.normal(k_feat, (N, FEAT), jnp.float32).astype(jnp.bfloat16)

    logits = model(box_feats, ForwardMode.UNSUPERVISED_VAL)
    logits = jax.block_until_ready(logits)
    assert logits.shape == (N, L + U)
    assert logits.dtype == jnp.float32

    # Exact check against a reference with identical bf16/f32 arithmetic.
    ref_bf16 = model.reference(box_feats, mimic_kernel_dtypes=True)
    assert jnp.allclose(logits, ref_bf16, atol=2e-2, rtol=2e-2), (
        float(jnp.max(jnp.abs(logits - ref_bf16))))

    # Loose sanity check against the pure-f32 module semantics (bf16 matmul
    # quantization is the only difference).
    ref_f32 = model.reference(box_feats, mimic_kernel_dtypes=False)
    assert float(jnp.max(jnp.abs(logits - ref_f32))) < 0.75

    # Ragged RoI count (exercises the row-padding path).
    box_feats2 = jax.random.normal(k_feat2, (100, FEAT), jnp.float32).astype(jnp.bfloat16)
    logits2 = jax.block_until_ready(model(box_feats2, ForwardMode.UNSUPERVISED_VAL))
    assert logits2.shape == (100, L + U)
    ref2 = model.reference(box_feats2, mimic_kernel_dtypes=True)
    assert jnp.allclose(logits2, ref2, atol=2e-2, rtol=2e-2)

    print("KERNEL_OK")
</pallas_src>

<mosaic_0001>
module attributes {stable_mosaic.version = 11 : i64} {
  func.func @_discovery_head_kernel(%arg0: i32, %arg1: memref<256x256xbf16, #tpu.memory_space<vmem>>, %arg2: memref<256x320xbf16, #tpu.memory_space<vmem>>, %arg3: memref<1x320xf32, #tpu.memory_space<vmem>>, %arg4: memref<256x192xbf16, #tpu.memory_space<vmem>>, %arg5: memref<1x192xf32, #tpu.memory_space<vmem>>, %arg6: memref<256x128xf32, #tpu.memory_space<vmem>>) attributes {dimension_semantics = [#tpu.dimension_semantics<parallel>], iteration_bounds = array<i64: 1>, scalar_prefetch = 0 : i64, scratch_operands = 0 : i64, tpu.core_type = #tpu.core_type<tc>, window_params = [{transform_indices = @transform_0, window_bounds = array<i64: 256, 256>}, {pipeline_mode = #tpu.pipeline_mode<synchronous>, transform_indices = @transform_1, window_bounds = array<i64: 256, 320>}, {pipeline_mode = #tpu.pipeline_mode<synchronous>, transform_indices = @transform_2, window_bounds = array<i64: 1, 320>}, {pipeline_mode = #tpu.pipeline_mode<synchronous>, transform_indices = @transform_3, window_bounds = array<i64: 256, 192>}, {pipeline_mode = #tpu.pipeline_mode<synchronous>, transform_indices = @transform_4, window_bounds = array<i64: 1, 192>}, {transform_indices = @transform_5, window_bounds = array<i64: 256, 128>}]} {
    %c0 = arith.constant 0 : index
    %c0_0 = arith.constant 0 : index
    %0 = vector.load %arg1[%c0, %c0_0] : memref<256x256xbf16, #tpu.memory_space<vmem>>, vector<256x256xbf16>
    %c0_1 = arith.constant 0 : index
    %c0_2 = arith.constant 0 : index
    %1 = vector.load %arg2[%c0_1, %c0_2] : memref<256x320xbf16, #tpu.memory_space<vmem>>, vector<256x320xbf16>
    %cst = arith.constant dense<0.000000e+00> : vector<256x320xf32>
    %2 = tpu.matmul %0, %1, %cst {dimension_numbers = #tpu.dot_dimension_numbers<[1], [0], [0], [1], [0, 0, 1, 1], [], []>} : vector<256x256xbf16>, vector<256x320xbf16>, vector<256x320xf32> -> vector<256x320xf32>
    %c0_3 = arith.constant 0 : index
    %c0_4 = arith.constant 0 : index
    %3 = vector.load %arg3[%c0_3, %c0_4] : memref<1x320xf32, #tpu.memory_space<vmem>>, vector<1x320xf32>
    %4 = vector.broadcast %3 : vector<1x320xf32> to vector<256x320xf32>
    %5 = arith.addf %2, %4 : vector<256x320xf32>
    %6 = vector.extract_strided_slice %5 {offsets = [0, 0], sizes = [256, 256], strides = [1, 1]} : vector<256x320xf32> to vector<256x256xf32>
    %cst_5 = arith.constant 0.000000e+00 : f32
    %7 = vector.broadcast %cst_5 : f32 to vector<256x256xf32>
    %8 = arith.maximumf %6, %7 : vector<256x256xf32>
    %9 = vector.extract_strided_slice %5 {offsets = [0, 256], sizes = [256, 64], strides = [1, 1]} : vector<256x320xf32> to vector<256x64xf32>
    %10 = arith.truncf %8 : vector<256x256xf32> to vector<256x256xbf16>
    %c0_6 = arith.constant 0 : index
    %c0_7 = arith.constant 0 : index
    %11 = vector.load %arg4[%c0_6, %c0_7] : memref<256x192xbf16, #tpu.memory_space<vmem>>, vector<256x192xbf16>
    %cst_8 = arith.constant dense<0.000000e+00> : vector<256x192xf32>
    %12 = tpu.matmul %10, %11, %cst_8 {dimension_numbers = #tpu.dot_dimension_numbers<[1], [0], [0], [1], [0, 0, 1, 1], [], []>} : vector<256x256xbf16>, vector<256x192xbf16>, vector<256x192xf32> -> vector<256x192xf32>
    %c0_9 = arith.constant 0 : index
    %c0_10 = arith.constant 0 : index
    %13 = vector.load %arg5[%c0_9, %c0_10] : memref<1x192xf32, #tpu.memory_space<vmem>>, vector<1x192xf32>
    %14 = vector.broadcast %13 : vector<1x192xf32> to vector<256x192xf32>
    %15 = arith.addf %12, %14 : vector<256x192xf32>
    %16 = vector.extract_strided_slice %15 {offsets = [0, 0], sizes = [256, 128], strides = [1, 1]} : vector<256x192xf32> to vector<256x128xf32>
    %17 = vector.extract_strided_slice %15 {offsets = [0, 128], sizes = [256, 64], strides = [1, 1]} : vector<256x192xf32> to vector<256x64xf32>
    %18 = arith.mulf %16, %16 : vector<256x128xf32>
    %cst_11 = arith.constant dense<0.000000e+00> : vector<256xf32>
    %19 = vector.multi_reduction <add>, %18, %cst_11 [1] : vector<256x128xf32> to vector<256xf32>
    %20 = vector.shape_cast %19 : vector<256xf32> to vector<256x1xf32>
    %cst_12 = arith.constant 9.99999996E-13 : f32
    %21 = vector.broadcast %cst_12 : f32 to vector<256x1xf32>
    %22 = arith.addf %20, %21 : vector<256x1xf32>
    %23 = math.rsqrt %22 : vector<256x1xf32>
    %cst_13 = arith.constant 1.000000e+01 : f32
    %24 = vector.broadcast %cst_13 : f32 to vector<256x1xf32>
    %25 = arith.mulf %24, %23 : vector<256x1xf32>
    %26 = vector.broadcast %25 : vector<256x1xf32> to vector<256x64xf32>
    %27 = arith.mulf %17, %26 : vector<256x64xf32>
    %28 = tpu.concatenate %9, %27 in 1 : vector<256x64xf32>, vector<256x64xf32> -> vector<256x128xf32>
    %c0_14 = arith.constant 0 : index
    %c0_15 = arith.constant 0 : index
    %29 = vector.load %arg6[%c0_14, %c0_15] : memref<256x128xf32, #tpu.memory_space<vmem>>, vector<256x128xf32>
    tpu.vector_store %arg6[%c0_14, %c0_15], %28 {strides = array<i32>} : memref<256x128xf32, #tpu.memory_space<vmem>>, vector<256x128xf32>,
    return
  }
  func.func @transform_0(%arg0: i32) -> (i32, i32) {
    %c0_i32 = arith.constant 0 : i32
    %c0_i32_0 = arith.constant 0 : i32
    return %arg0, %c0_i32 : i32, i32
  }
  func.func @transform_1(%arg0: i32) -> (i32, i32) {
    %c0_i32 = arith.constant 0 : i32
    %c0_i32_0 = arith.constant 0 : i32
    %c0_i32_1 = arith.constant 0 : i32
    return %c0_i32, %c0_i32_0 : i32, i32
  }
  func.func @transform_2(%arg0: i32) -> (i32, i32) {
    %c0_i32 = arith.constant 0 : i32
    %c0_i32_0 = arith.constant 0 : i32
    %c0_i32_1 = arith.constant 0 : i32
    return %c0_i32, %c0_i32_0 : i32, i32
  }
  func.func @transform_3(%arg0: i32) -> (i32, i32) {
    %c0_i32 = arith.constant 0 : i32
    %c0_i32_0 = arith.constant 0 : i32
    %c0_i32_1 = arith.constant 0 : i32
    return %c0_i32, %c0_i32_0 : i32, i32
  }
  func.func @transform_4(%arg0: i32) -> (i32, i32) {
    %c0_i32 = arith.constant 0 : i32
    %c0_i32_0 = arith.constant 0 : i32
    %c0_i32_1 = arith.constant 0 : i32
    return %c0_i32, %c0_i32_0 : i32, i32
  }
  func.func @transform_5(%arg0: i32) -> (i32, i32) {
    %c0_i32 = arith.constant 0 : i32
    %c0_i32_0 = arith.constant 0 : i32
    return %arg0, %c0_i32 : i32, i32
  }
}

</mosaic_0001>

<llo_original>
// kernel: tpu_custom_call.1
$region0: #{tpu_custom_call.1}
  #allocation0 [shape = 'u32[]', space=smem, size = 0x4, offset = 0x4, fixed_abs, tag = 'smem constant byte address 0x4 - core index']
  #allocation1 [shape = 'u32[144,128]{1,0:T(1,128)}', space=vmem, size = 0x12000, scoped, tag = 'internal scratch']
  %s0 = inlined_call_operand.vmem [shape: bf16[256,256], index: 0, kind: input, shape index: {}]
  %s1 = inlined_call_operand.vmem [shape: bf16[256,320], index: 1, kind: input, shape index: {}]
  %s2 = inlined_call_operand.vmem [shape: f32[1,320], index: 2, kind: input, shape index: {}]
  %s3 = inlined_call_operand.vmem [shape: bf16[256,192], index: 3, kind: input, shape index: {}]
  %s4 = inlined_call_operand.vmem [shape: f32[1,192], index: 4, kind: input, shape index: {}]
  %s5 = inlined_call_operand.hbm [shape: f32[256,128], index: 5, kind: output, shape index: {}]
  %s6 = sld [smem:[#allocation0]]
  $region30: #{tpu_custom_call.1} parent=0
    _
  %s8 = ssub.s32 1, %s6
  %s9 = scalar_select 0, %s8, %s6
  $region1: #{tpu_custom_call.1} parent=0
    #allocation2 [shape = 'u8[131072]{0}', space=vmem, size = 0x20000, scoped, tag = 'output window, operand 0, single buffered']
    #allocation3 [shape = 's32[1]{0}', space=sflag, size = 0x4, scoped, tag = 'scoped memory for tpu_custom_call.1']
    %10 = vsyncpa [#allocation3], 0
    // Predicated region
    $region2: #{tpu_custom_call.1} parent=1 // pred_check
      _
    $region3: #{tpu_custom_call.1} parent=1 // pred_check_branch
      %12 = sbr.rel (0) target = $region5
    $region4: #{tpu_custom_call.1} parent=1 // pred_region
      _
    $region5: #{tpu_custom_call.1} parent=1 // pred_fallthru
      _
    // Predicated region
    $region6: #{tpu_custom_call.1} parent=1 // pred_check
      _
    $region7: #{tpu_custom_call.1} parent=1 // pred_check_branch
      %14 = sbr.rel (0) target = $region9
    $region8: #{tpu_custom_call.1} parent=1 // pred_region
      _
    $region9: #{tpu_custom_call.1} parent=1 // pred_fallthru
      _
    // Predicated region
    $region10: #{tpu_custom_call.1} parent=1 // pred_check
      _
    $region11: #{tpu_custom_call.1} parent=1 // pred_check_branch
      %16 = sbr.rel (0) target = $region13
    $region12: #{tpu_custom_call.1} parent=1 // pred_region
      _
    $region13: #{tpu_custom_call.1} parent=1 // pred_fallthru
      _
    // Predicated region
    $region14: #{tpu_custom_call.1} parent=1 // pred_check
      _
    $region15: #{tpu_custom_call.1} parent=1 // pred_check_branch
      %18 = sbr.rel (0) target = $region17
    $region16: #{tpu_custom_call.1} parent=1 // pred_region
      _
    $region17: #{tpu_custom_call.1} parent=1 // pred_fallthru
      _
    // Predicated region
    $region18: #{tpu_custom_call.1} parent=1 // pred_check
      _
    $region19: #{tpu_custom_call.1} parent=1 // pred_check_branch
      %20 = sbr.rel (0) target = $region21
    $region20: #{tpu_custom_call.1} parent=1 // pred_region
      _
    $region21: #{tpu_custom_call.1} parent=1 // pred_fallthru
      _
    %v22 = vld [vmem:[%s0] sm:$0xff]
    %v23 = vld [vmem:[%s0 + $0x8] sm:$0xff]
    %v24 = vld [vmem:[%s0 + $0x10] sm:$0xff]
    %v25 = vld [vmem:[%s0 + $0x18] sm:$0xff]
    %v26 = vld [vmem:[%s0 + $0x20] sm:$0xff]
    %v27 = vld [vmem:[%s0 + $0x28] sm:$0xff]
    %v28 = vld [vmem:[%s0 + $0x30] sm:$0xff]
    %v29 = vld [vmem:[%s0 + $0x38] sm:$0xff]
    %v30 = vld [vmem:[%s0 + $0x40] sm:$0xff]
    %v31 = vld [vmem:[%s0 + $0x48] sm:$0xff]
    %v32 = vld [vmem:[%s0 + $0x50] sm:$0xff]
    %v33 = vld [vmem:[%s0 + $0x58] sm:$0xff]
    %v34 = vld [vmem:[%s0 + $0x60] sm:$0xff]
    %v35 = vld [vmem:[%s0 + $0x68] sm:$0xff]
    %v36 = vld [vmem:[%s0 + $0x70] sm:$0xff]
    %v37 = vld [vmem:[%s0 + $0x78] sm:$0xff]
    %v38 = vld [vmem:[%s0 + $0x80] sm:$0xff]
    %v39 = vld [vmem:[%s0 + $0x88] sm:$0xff]
    %v40 = vld [vmem:[%s0 + $0x90] sm:$0xff]
    %v41 = vld [vmem:[%s0 + $0x98] sm:$0xff]
    %v42 = vld [vmem:[%s0 + $0xa0] sm:$0xff]
    %v43 = vld [vmem:[%s0 + $0xa8] sm:$0xff]
    %v44 = vld [vmem:[%s0 + $0xb0] sm:$0xff]
    %v45 = vld [vmem:[%s0 + $0xb8] sm:$0xff]
    %v46 = vld [vmem:[%s0 + $0xc0] sm:$0xff]
    %v47 = vld [vmem:[%s0 + $0xc8] sm:$0xff]
    %v48 = vld [vmem:[%s0 + $0xd0] sm:$0xff]
    %v49 = vld [vmem:[%s0 + $0xd8] sm:$0xff]
    %v50 = vld [vmem:[%s0 + $0xe0] sm:$0xff]
    %v51 = vld [vmem:[%s0 + $0xe8] sm:$0xff]
    %v52 = vld [vmem:[%s0 + $0xf0] sm:$0xff]
    %v53 = vld [vmem:[%s0 + $0xf8] sm:$0xff]
    %v54 = vld [vmem:[%s1] sm:$0xff]
    %v55 = vld [vmem:[%s1 + $0x8] sm:$0xf]
    %v56 = vld [vmem:[%s1 + $0xc] sm:$0xff]
    %v57 = vld [vmem:[%s1 + $0x14] sm:$0xf]
    %v58 = vld [vmem:[%s1 + $0x18] sm:$0xff]
    %v59 = vld [vmem:[%s1 + $0x20] sm:$0xf]
    %v60 = vld [vmem:[%s1 + $0x24] sm:$0xff]
    %v61 = vld [vmem:[%s1 + $0x2c] sm:$0xf]
    %v62 = vld [vmem:[%s1 + $0x30] sm:$0xff]
    %v63 = vld [vmem:[%s1 + $0x38] sm:$0xf]
    %v64 = vld [vmem:[%s1 + $0x3c] sm:$0xff]
    %v65 = vld [vmem:[%s1 + $0x44] sm:$0xf]
    %v66 = vld [vmem:[%s1 + $0x48] sm:$0xff]
    %v67 = vld [vmem:[%s1 + $0x50] sm:$0xf]
    %v68 = vld [vmem:[%s1 + $0x54] sm:$0xff]
    %v69 = vld [vmem:[%s1 + $0x5c] sm:$0xf]
    %v70 = vld [vmem:[%s1 + $0x60] sm:$0xff]
    %v71 = vld [vmem:[%s1 + $0x68] sm:$0xf]
    %v72 = vld [vmem:[%s1 + $0x6c] sm:$0xff]
    %v73 = vld [vmem:[%s1 + $0x74] sm:$0xf]
    %v74 = vld [vmem:[%s1 + $0x78] sm:$0xff]
    %v75 = vld [vmem:[%s1 + $0x80] sm:$0xf]
    %v76 = vld [vmem:[%s1 + $0x84] sm:$0xff]
    %v77 = vld [vmem:[%s1 + $0x8c] sm:$0xf]
    %v78 = vld [vmem:[%s1 + $0x90] sm:$0xff]
    %v79 = vld [vmem:[%s1 + $0x98] sm:$0xf]
    %v80 = vld [vmem:[%s1 + $0x9c] sm:$0xff]
    %v81 = vld [vmem:[%s1 + $0xa4] sm:$0xf]
    %v82 = vld [vmem:[%s1 + $0xa8] sm:$0xff]
    %v83 = vld [vmem:[%s1 + $0xb0] sm:$0xf]
    %v84 = vld [vmem:[%s1 + $0xb4] sm:$0xff]
    %v85 = vld [vmem:[%s1 + $0xbc] sm:$0xf]
    %v86 = vld [vmem:[%s1 + $0xc0] sm:$0xff]
    %v87 = vld [vmem:[%s1 + $0xc8] sm:$0xf]
    %v88 = vld [vmem:[%s1 + $0xcc] sm:$0xff]
    %v89 = vld [vmem:[%s1 + $0xd4] sm:$0xf]
    %v90 = vld [vmem:[%s1 + $0xd8] sm:$0xff]
    %v91 = vld [vmem:[%s1 + $0xe0] sm:$0xf]
    %v92 = vld [vmem:[%s1 + $0xe4] sm:$0xff]
    %v93 = vld [vmem:[%s1 + $0xec] sm:$0xf]
    %v94 = vld [vmem:[%s1 + $0xf0] sm:$0xff]
    %v95 = vld [vmem:[%s1 + $0xf8] sm:$0xf]
    %v96 = vld [vmem:[%s1 + $0xfc] sm:$0xff]
    %v97 = vld [vmem:[%s1 + $0x104] sm:$0xf]
    %v98 = vld [vmem:[%s1 + $0x108] sm:$0xff]
    %v99 = vld [vmem:[%s1 + $0x110] sm:$0xf]
    %v100 = vld [vmem:[%s1 + $0x114] sm:$0xff]
    %v101 = vld [vmem:[%s1 + $0x11c] sm:$0xf]
    %v102 = vld [vmem:[%s1 + $0x120] sm:$0xff]
    %v103 = vld [vmem:[%s1 + $0x128] sm:$0xf]
    %v104 = vld [vmem:[%s1 + $0x12c] sm:$0xff]
    %v105 = vld [vmem:[%s1 + $0x134] sm:$0xf]
    %v106 = vld [vmem:[%s1 + $0x138] sm:$0xff]
    %v107 = vld [vmem:[%s1 + $0x140] sm:$0xf]
    %v108 = vld [vmem:[%s1 + $0x144] sm:$0xff]
    %v109 = vld [vmem:[%s1 + $0x14c] sm:$0xf]
    %v110 = vld [vmem:[%s1 + $0x150] sm:$0xff]
    %v111 = vld [vmem:[%s1 + $0x158] sm:$0xf]
    %v112 = vld [vmem:[%s1 + $0x15c] sm:$0xff]
    %v113 = vld [vmem:[%s1 + $0x164] sm:$0xf]
    %v114 = vld [vmem:[%s1 + $0x168] sm:$0xff]
    %v115 = vld [vmem:[%s1 + $0x170] sm:$0xf]
    %v116 = vld [vmem:[%s1 + $0x174] sm:$0xff]
    %v117 = vld [vmem:[%s1 + $0x17c] sm:$0xf]
    %v118 = vld [vmem:[%s2] sm:$0x7]
    %v120 = vlaneseq
    %v121 = vshrl.u32 %v120, 7
    %v122 = vsub.s32 0, %v121
    %v123 = vrot.slane %v118, %v122
    %v124 = vlaneseq
    %v125 = vshrl.u32 %v124, 7
    %v126 = vsub.s32 1, %v125
    %v127 = vrot.slane %v118, %v126
    %v128 = vlaneseq
    %v129 = vshrl.u32 %v128, 7
    %v130 = vsub.s32 2, %v129
    %v131 = vrot.slane %v118, %v130
    %v167 = vunpack.c.l.b16 %v22
    %v168 = vunpack.c.h.b16 %v22
    %v169 = vunpack.c.l.b16 %v23
    %v170 = vunpack.c.h.b16 %v23
    %v171 = vunpack.c.l.b16 %v24
    %v172 = vunpack.c.h.b16 %v24
    %v173 = vunpack.c.l.b16 %v25
    %v174 = vunpack.c.h.b16 %v25
    %v175 = vunpack.c.l.b16 %v26
    %v176 = vunpack.c.h.b16 %v26
    %v177 = vunpack.c.l.b16 %v27
    %v178 = vunpack.c.h.b16 %v27
    %v179 = vunpack.c.l.b16 %v28
    %v180 = vunpack.c.h.b16 %v28
    %v181 = vunpack.c.l.b16 %v29
    %v182 = vunpack.c.h.b16 %v29
    %v183 = vunpack.c.l.b16 %v30
    %v184 = vunpack.c.h.b16 %v30
    %v185 = vunpack.c.l.b16 %v31
    %v186 = vunpack.c.h.b16 %v31
    %v187 = vunpack.c.l.b16 %v32
    %v188 = vunpack.c.h.b16 %v32
    %v189 = vunpack.c.l.b16 %v33
    %v190 = vunpack.c.h.b16 %v33
    %v191 = vunpack.c.l.b16 %v34
    %v192 = vunpack.c.h.b16 %v34
    %v193 = vunpack.c.l.b16 %v35
    %v194 = vunpack.c.h.b16 %v35
    %v195 = vunpack.c.l.b16 %v36
    %v196 = vunpack.c.h.b16 %v36
    %v197 = vunpack.c.l.b16 %v37
    %v198 = vunpack.c.h.b16 %v37
    %v199 = vunpack.c.l.b16 %v38
    %v200 = vunpack.c.h.b16 %v38
    %v201 = vunpack.c.l.b16 %v39
    %v202 = vunpack.c.h.b16 %v39
    %v203 = vunpack.c.l.b16 %v40
    %v204 = vunpack.c.h.b16 %v40
    %v205 = vunpack.c.l.b16 %v41
    %v206 = vunpack.c.h.b16 %v41
    %v207 = vunpack.c.l.b16 %v42
    %v208 = vunpack.c.h.b16 %v42
    %v209 = vunpack.c.l.b16 %v43
    %v210 = vunpack.c.h.b16 %v43
    %v211 = vunpack.c.l.b16 %v44
    %v212 = vunpack.c.h.b16 %v44
    %v213 = vunpack.c.l.b16 %v45
    %v214 = vunpack.c.h.b16 %v45
    %v215 = vunpack.c.l.b16 %v46
    %v216 = vunpack.c.h.b16 %v46
    %v217 = vunpack.c.l.b16 %v47
    %v218 = vunpack.c.h.b16 %v47
    %v219 = vunpack.c.l.b16 %v48
    %v220 = vunpack.c.h.b16 %v48
    %v221 = vunpack.c.l.b16 %v49
    %v222 = vunpack.c.h.b16 %v49
    %v223 = vunpack.c.l.b16 %v50
    %v224 = vunpack.c.h.b16 %v50
    %v225 = vunpack.c.l.b16 %v51
    %v226 = vunpack.c.h.b16 %v51
    %v227 = vunpack.c.l.b16 %v52
    %v228 = vunpack.c.h.b16 %v52
    %v229 = vunpack.c.l.b16 %v53
    %v230 = vunpack.c.h.b16 %v53
    %v231 = vpack.c.b16 %v169, %v167
    %v232 = vpack.c.b16 %v170, %v168
    %v233 = vpack.c.b16 %v173, %v171
    %v234 = vpack.c.b16 %v174, %v172
    %v235 = vpack.c.b16 %v177, %v175
    %v236 = vpack.c.b16 %v178, %v176
    %v237 = vpack.c.b16 %v181, %v179
    %v238 = vpack.c.b16 %v182, %v180
    %v239 = vpack.c.b16 %v185, %v183
    %v240 = vpack.c.b16 %v186, %v184
    %v241 = vpack.c.b16 %v189, %v187
    %v242 = vpack.c.b16 %v190, %v188
    %v243 = vpack.c.b16 %v193, %v191
    %v244 = vpack.c.b16 %v194, %v192
    %v245 = vpack.c.b16 %v197, %v195
    %v246 = vpack.c.b16 %v198, %v196
    %v247 = vpack.c.b16 %v201, %v199
    %v248 = vpack.c.b16 %v202, %v200
    %v249 = vpack.c.b16 %v205, %v203
    %v250 = vpack.c.b16 %v206, %v204
    %v251 = vpack.c.b16 %v209, %v207
    %v252 = vpack.c.b16 %v210, %v208
    %v253 = vpack.c.b16 %v213, %v211
    %v254 = vpack.c.b16 %v214, %v212
    %v255 = vpack.c.b16 %v217, %v215
    %v256 = vpack.c.b16 %v218, %v216
    %v257 = vpack.c.b16 %v221, %v219
    %v258 = vpack.c.b16 %v222, %v220
    %v259 = vpack.c.b16 %v225, %v223
    %v260 = vpack.c.b16 %v226, %v224
    %v261 = vpack.c.b16 %v229, %v227
    %v262 = vpack.c.b16 %v230, %v228
    %v359 = vunpack.c.l.b16 %v54
    %v360 = vunpack.c.h.b16 %v54
    %v361 = vunpack.c.l.b16 %v55
    %v362 = vunpack.c.l.b16 %v56
    %v363 = vunpack.c.h.b16 %v56
    %v364 = vunpack.c.l.b16 %v57
    %v365 = vunpack.c.l.b16 %v58
    %v366 = vunpack.c.h.b16 %v58
    %v367 = vunpack.c.l.b16 %v59
    %v368 = vunpack.c.l.b16 %v60
    %v369 = vunpack.c.h.b16 %v60
    %v370 = vunpack.c.l.b16 %v61
    %v371 = vunpack.c.l.b16 %v62
    %v372 = vunpack.c.h.b16 %v62
    %v373 = vunpack.c.l.b16 %v63
    %v374 = vunpack.c.l.b16 %v64
    %v375 = vunpack.c.h.b16 %v64
    %v376 = vunpack.c.l.b16 %v65
    %v377 = vunpack.c.l.b16 %v66
    %v378 = vunpack.c.h.b16 %v66
    %v379 = vunpack.c.l.b16 %v67
    %v380 = vunpack.c.l.b16 %v68
    %v381 = vunpack.c.h.b16 %v68
    %v382 = vunpack.c.l.b16 %v69
    %v383 = vunpack.c.l.b16 %v70
    %v384 = vunpack.c.h.b16 %v70
    %v385 = vunpack.c.l.b16 %v71
    %v386 = vunpack.c.l.b16 %v72
    %v387 = vunpack.c.h.b16 %v72
    %v388 = vunpack.c.l.b16 %v73
    %v389 = vunpack.c.l.b16 %v74
    %v390 = vunpack.c.h.b16 %v74
    %v391 = vunpack.c.l.b16 %v75
    %v392 = vunpack.c.l.b16 %v76
    %v393 = vunpack.c.h.b16 %v76
    %v394 = vunpack.c.l.b16 %v77
    %v395 = vunpack.c.l.b16 %v78
    %v396 = vunpack.c.h.b16 %v78
    %v397 = vunpack.c.l.b16 %v79
    %v398 = vunpack.c.l.b16 %v80
    %v399 = vunpack.c.h.b16 %v80
    %v400 = vunpack.c.l.b16 %v81
    %v401 = vunpack.c.l.b16 %v82
    %v402 = vunpack.c.h.b16 %v82
    %v403 = vunpack.c.l.b16 %v83
    %v404 = vunpack.c.l.b16 %v84
    %v405 = vunpack.c.h.b16 %v84
    %v406 = vunpack.c.l.b16 %v85
    %v407 = vunpack.c.l.b16 %v86
    %v408 = vunpack.c.h.b16 %v86
    %v409 = vunpack.c.l.b16 %v87
    %v410 = vunpack.c.l.b16 %v88
    %v411 = vunpack.c.h.b16 %v88
    %v412 = vunpack.c.l.b16 %v89
    %v413 = vunpack.c.l.b16 %v90
    %v414 = vunpack.c.h.b16 %v90
    %v415 = vunpack.c.l.b16 %v91
    %v416 = vunpack.c.l.b16 %v92
    %v417 = vunpack.c.h.b16 %v92
    %v418 = vunpack.c.l.b16 %v93
    %v419 = vunpack.c.l.b16 %v94
    %v420 = vunpack.c.h.b16 %v94
    %v421 = vunpack.c.l.b16 %v95
    %v422 = vunpack.c.l.b16 %v96
    %v423 = vunpack.c.h.b16 %v96
    %v424 = vunpack.c.l.b16 %v97
    %v425 = vunpack.c.l.b16 %v98
    %v426 = vunpack.c.h.b16 %v98
    %v427 = vunpack.c.l.b16 %v99
    %v428 = vunpack.c.l.b16 %v100
    %v429 = vunpack.c.h.b16 %v100
    %v430 = vunpack.c.l.b16 %v101
    %v431 = vunpack.c.l.b16 %v102
    %v432 = vunpack.c.h.b16 %v102
    %v433 = vunpack.c.l.b16 %v103
    %v434 = vunpack.c.l.b16 %v104
    %v435 = vunpack.c.h.b16 %v104
    %v436 = vunpack.c.l.b16 %v105
    %v437 = vunpack.c.l.b16 %v106
    %v438 = vunpack.c.h.b16 %v106
    %v439 = vunpack.c.l.b16 %v107
    %v440 = vunpack.c.l.b16 %v108
    %v441 = vunpack.c.h.b16 %v108
    %v442 = vunpack.c.l.b16 %v109
    %v443 = vunpack.c.l.b16 %v110
    %v444 = vunpack.c.h.b16 %v110
    %v445 = vunpack.c.l.b16 %v111
    %v446 = vunpack.c.l.b16 %v112
    %v447 = vunpack.c.h.b16 %v112
    %v448 = vunpack.c.l.b16 %v113
    %v449 = vunpack.c.l.b16 %v114
    %v450 = vunpack.c.h.b16 %v114
    %v451 = vunpack.c.l.b16 %v115
    %v452 = vunpack.c.l.b16 %v116
    %v453 = vunpack.c.h.b16 %v116
    %v454 = vunpack.c.l.b16 %v117
    %v455 = vpack.c.b16 %v362, %v359
    %v456 = vpack.c.b16 %v363, %v360
    %v457 = vpack.c.b16 %v364, %v361
    %v458 = vpack.c.b16 %v368, %v365
    %v459 = vpack.c.b16 %v369, %v366
    %v460 = vpack.c.b16 %v370, %v367
    %v461 = vpack.c.b16 %v374, %v371
    %v462 = vpack.c.b16 %v375, %v372
    %v463 = vpack.c.b16 %v376, %v373
    %v464 = vpack.c.b16 %v380, %v377
    %v465 = vpack.c.b16 %v381, %v378
    %v466 = vpack.c.b16 %v382, %v379
    %v467 = vpack.c.b16 %v386, %v383
    %v468 = vpack.c.b16 %v387, %v384
    %v469 = vpack.c.b16 %v388, %v385
    %v470 = vpack.c.b16 %v392, %v389
    %v471 = vpack.c.b16 %v393, %v390
    %v472 = vpack.c.b16 %v394, %v391
    %v473 = vpack.c.b16 %v398, %v395
    %v474 = vpack.c.b16 %v399, %v396
    %v475 = vpack.c.b16 %v400, %v397
    %v476 = vpack.c.b16 %v404, %v401
    %v477 = vpack.c.b16 %v405, %v402
    %v478 = vpack.c.b16 %v406, %v403
    %v479 = vpack.c.b16 %v410, %v407
    %v480 = vpack.c.b16 %v411, %v408
    %v481 = vpack.c.b16 %v412, %v409
    %v482 = vpack.c.b16 %v416, %v413
    %v483 = vpack.c.b16 %v417, %v414
    %v484 = vpack.c.b16 %v418, %v415
    %v485 = vpack.c.b16 %v422, %v419
    %v486 = vpack.c.b16 %v423, %v420
    %v487 = vpack.c.b16 %v424, %v421
    %v488 = vpack.c.b16 %v428, %v425
    %v489 = vpack.c.b16 %v429, %v426
    %v490 = vpack.c.b16 %v430, %v427
    %v491 = vpack.c.b16 %v434, %v431
    %v492 = vpack.c.b16 %v435, %v432
    %v493 = vpack.c.b16 %v436, %v433
    %v494 = vpack.c.b16 %v440, %v437
    %v495 = vpack.c.b16 %v441, %v438
    %v496 = vpack.c.b16 %v442, %v439
    %v497 = vpack.c.b16 %v446, %v443
    %v498 = vpack.c.b16 %v447, %v444
    %v499 = vpack.c.b16 %v448, %v445
    %v500 = vpack.c.b16 %v452, %v449
    %v501 = vpack.c.b16 %v453, %v450
    %v502 = vpack.c.b16 %v454, %v451
    %551 = vmatprep.subr.bf16.mxu0 %v456
    %552 = vmatpush1.bf16.msra.mxu0 %v455
    %553 = vmatprep.subr.bf16.mxu0 %v459
    %554 = vmatpush1.bf16.msra.mxu0 %v458
    %555 = vmatprep.subr.bf16.mxu0 %v462
    %556 = vmatpush1.bf16.msra.mxu0 %v461
    %557 = vmatprep.subr.bf16.mxu0 %v465
    %558 = vmatpush1.bf16.msra.mxu0 %v464
    %559 = vmatprep.subr.bf16.mxu0 %v468
    %560 = vmatpush1.bf16.msra.mxu0 %v467
    %561 = vmatprep.subr.bf16.mxu0 %v471
    %562 = vmatpush1.bf16.msra.mxu0 %v470
    %563 = vmatprep.subr.bf16.mxu0 %v474
    %564 = vmatpush1.bf16.msra.mxu0 %v473
    %565 = vmatprep.subr.bf16.mxu0 %v477
    %566 = vmatpush1.bf16.msra.mxu0 %v476
    %567 = vmatprep.subr.bf16.mxu0 %v480
    %568 = vmatpush1.bf16.msra.mxu0 %v479
    %569 = vmatprep.subr.bf16.mxu0 %v483
    %570 = vmatpush1.bf16.msra.mxu0 %v482
    %571 = vmatprep.subr.bf16.mxu0 %v486
    %572 = vmatpush1.bf16.msra.mxu0 %v485
    %573 = vmatprep.subr.bf16.mxu0 %v489
    %574 = vmatpush1.bf16.msra.mxu0 %v488
    %575 = vmatprep.subr.bf16.mxu0 %v492
    %576 = vmatpush1.bf16.msra.mxu0 %v491
    %577 = vmatprep.subr.bf16.mxu0 %v495
    %578 = vmatpush1.bf16.msra.mxu0 %v494
    %579 = vmatprep.subr.bf16.mxu0 %v498
    %580 = vmatpush1.bf16.msra.mxu0 %v497
    %581 = vmatprep.subr.bf16.mxu0 %v501
    %582 = vmatpush1.bf16.msra.mxu0 %v500
    %583 = vmatprep.mubr.bf16.mxu0 %v232
    %584 = vmatmul.mubr.bf16.gmra.mrb[0].mxu0 %v231
    %v585 = vpop.f32.mrb[0].mxu0
    %v586 = vadd.f32 %v123, %v585
    %v587 = vpop.f32.mrb[0].mxu0
    %v588 = vadd.f32 %v127, %v587
    %v589 = vpop.f32.mrb[0].mxu0
    %v590 = vadd.f32 %v123, %v589
    %v591 = vpop.f32.mrb[0].mxu0
    %v592 = vadd.f32 %v127, %v591
    %593 = vmatprep.mubr.bf16.mxu0 %v234
    %594 = vmatmul.mubr.bf16.gmra.mrb[0].mxu0 %v233
    %v595 = vpop.f32.mrb[0].mxu0
    %v596 = vadd.f32 %v123, %v595
    %v597 = vpop.f32.mrb[0].mxu0
    %v598 = vadd.f32 %v127, %v597
    %v599 = vpop.f32.mrb[0].mxu0
    %v600 = vadd.f32 %v123, %v599
    %v601 = vpop.f32.mrb[0].mxu0
    %v602 = vadd.f32 %v127, %v601
    %603 = vmatprep.mubr.bf16.mxu0 %v236
    %604 = vmatmul.mubr.bf16.gmra.mrb[0].mxu0 %v235
    %v605 = vpop.f32.mrb[0].mxu0
    %v606 = vadd.f32 %v123, %v605
    %v607 = vpop.f32.mrb[0].mxu0
    %v608 = vadd.f32 %v127, %v607
    %v609 = vpop.f32.mrb[0].mxu0
    %v610 = vadd.f32 %v123, %v609
    %v611 = vpop.f32.mrb[0].mxu0
    %v612 = vadd.f32 %v127, %v611
    %613 = vmatprep.mubr.bf16.mxu0 %v238
    %614 = vmatmul.mubr.bf16.gmra.mrb[0].mxu0 %v237
    %v615 = vpop.f32.mrb[0].mxu0
    %v616 = vadd.f32 %v123, %v615
    %v617 = vpop.f32.mrb[0].mxu0
    %v618 = vadd.f32 %v127, %v617
    %v619 = vpop.f32.mrb[0].mxu0
    %v620 = vadd.f32 %v123, %v619
    %v621 = vpop.f32.mrb[0].mxu0
    %v622 = vadd.f32 %v127, %v621
    %623 = vmatprep.mubr.bf16.mxu0 %v240
    %624 = vmatmul.mubr.bf16.gmra.mrb[0].mxu0 %v239
    %v625 = vpop.f32.mrb[0].mxu0
    %v626 = vadd.f32 %v123, %v625
    %v627 = vpop.f32.mrb[0].mxu0
    %v628 = vadd.f32 %v127, %v627
    %v629 = vpop.f32.mrb[0].mxu0
    %v630 = vadd.f32 %v123, %v629
    %v631 = vpop.f32.mrb[0].mxu0
    %v632 = vadd.f32 %v127, %v631
    %633 = vmatprep.mubr.bf16.mxu0 %v242
    %634 = vmatmul.mubr.bf16.gmra.mrb[0].mxu0 %v241
    %v635 = vpop.f32.mrb[0].mxu0
    %v636 = vadd.f32 %v123, %v635
    %v637 = vpop.f32.mrb[0].mxu0
    %v638 = vadd.f32 %v127, %v637
    %v639 = vpop.f32.mrb[0].mxu0
    %v640 = vadd.f32 %v123, %v639
    %v641 = vpop.f32.mrb[0].mxu0
    %v642 = vadd.f32 %v127, %v641
    %643 = vmatprep.mubr.bf16.mxu0 %v244
    %644 = vmatmul.mubr.bf16.gmra.mrb[0].mxu0 %v243
    %v645 = vpop.f32.mrb[0].mxu0
    %v646 = vadd.f32 %v123, %v645
    %v647 = vpop.f32.mrb[0].mxu0
    %v648 = vadd.f32 %v127, %v647
    %v649 = vpop.f32.mrb[0].mxu0
    %v650 = vadd.f32 %v123, %v649
    %v651 = vpop.f32.mrb[0].mxu0
    %v652 = vadd.f32 %v127, %v651
    %653 = vmatprep.mubr.bf16.mxu0 %v246
    %654 = vmatmul.mubr.bf16.gmra.mrb[0].mxu0 %v245
    %v655 = vpop.f32.mrb[0].mxu0
    %v656 = vadd.f32 %v123, %v655
    %v657 = vpop.f32.mrb[0].mxu0
    %v658 = vadd.f32 %v127, %v657
    %v659 = vpop.f32.mrb[0].mxu0
    %v660 = vadd.f32 %v123, %v659
    %v661 = vpop.f32.mrb[0].mxu0
    %v662 = vadd.f32 %v127, %v661
    %663 = vmatprep.mubr.bf16.mxu0 %v248
    %664 = vmatmul.mubr.bf16.gmra.mrb[0].mxu0 %v247
    %v665 = vpop.f32.mrb[0].mxu0
    %v666 = vadd.f32 %v123, %v665
    %v667 = vpop.f32.mrb[0].mxu0
    %v668 = vadd.f32 %v127, %v667
    %v669 = vpop.f32.mrb[0].mxu0
    %v670 = vadd.f32 %v123, %v669
    %v671 = vpop.f32.mrb[0].mxu0
    %v672 = vadd.f32 %v127, %v671
    %673 = vmatprep.mubr.bf16.mxu0 %v250
    %674 = vmatmul.mubr.bf16.gmra.mrb[0].mxu0 %v249
    %v675 = vpop.f32.mrb[0].mxu0
    %v676 = vadd.f32 %v123, %v675
    %v677 = vpop.f32.mrb[0].mxu0
    %v678 = vadd.f32 %v127, %v677
    %v679 = vpop.f32.mrb[0].mxu0
    %v680 = vadd.f32 %v123, %v679
    %v681 = vpop.f32.mrb[0].mxu0
    %v682 = vadd.f32 %v127, %v681
    %683 = vmatprep.mubr.bf16.mxu0 %v252
    %684 = vmatmul.mubr.bf16.gmra.mrb[0].mxu0 %v251
    %v685 = vpop.f32.mrb[0].mxu0
    %v686 = vadd.f32 %v123, %v685
    %v687 = vpop.f32.mrb[0].mxu0
    %v688 = vadd.f32 %v127, %v687
    %v689 = vpop.f32.mrb[0].mxu0
    %v690 = vadd.f32 %v123, %v689
    %v691 = vpop.f32.mrb[0].mxu0
    %v692 = vadd.f32 %v127, %v691
    %693 = vmatprep.mubr.bf16.mxu0 %v254
    %694 = vmatmul.mubr.bf16.gmra.mrb[0].mxu0 %v253
    %v695 = vpop.f32.mrb[0].mxu0
    %v696 = vadd.f32 %v123, %v695
    %v697 = vpop.f32.mrb[0].mxu0
    %v698 = vadd.f32 %v127, %v697
    %v699 = vpop.f32.mrb[0].mxu0
    %v700 = vadd.f32 %v123, %v699
    %v701 = vpop.f32.mrb[0].mxu0
    %v702 = vadd.f32 %v127, %v701
    %703 = vmatprep.mubr.bf16.mxu0 %v256
    %704 = vmatmul.mubr.bf16.gmra.mrb[0].mxu0 %v255
    %v705 = vpop.f32.mrb[0].mxu0
    %v706 = vadd.f32 %v123, %v705
    %v707 = vpop.f32.mrb[0].mxu0
    %v708 = vadd.f32 %v127, %v707
    %v709 = vpop.f32.mrb[0].mxu0
    %v710 = vadd.f32 %v123, %v709
    %v711 = vpop.f32.mrb[0].mxu0
    %v712 = vadd.f32 %v127, %v711
    %713 = vmatprep.mubr.bf16.mxu0 %v258
    %714 = vmatmul.mubr.bf16.gmra.mrb[0].mxu0 %v257
    %v715 = vpop.f32.mrb[0].mxu0
    %v716 = vadd.f32 %v123, %v715
    %v717 = vpop.f32.mrb[0].mxu0
    %v718 = vadd.f32 %v127, %v717
    %v719 = vpop.f32.mrb[0].mxu0
    %v720 = vadd.f32 %v123, %v719
    %v721 = vpop.f32.mrb[0].mxu0
    %v722 = vadd.f32 %v127, %v721
    %723 = vmatprep.mubr.bf16.mxu0 %v260
    %724 = vmatmul.mubr.bf16.gmra.mrb[0].mxu0 %v259
    %v725 = vpop.f32.mrb[0].mxu0
    %v726 = vadd.f32 %v123, %v725
    %v727 = vpop.f32.mrb[0].mxu0
    %v728 = vadd.f32 %v127, %v727
    %v729 = vpop.f32.mrb[0].mxu0
    %v730 = vadd.f32 %v123, %v729
    %v731 = vpop.f32.mrb[0].mxu0
    %v732 = vadd.f32 %v127, %v731
    %733 = vmatprep.mubr.bf16.mxu0 %v262
    %734 = vmatmul.mubr.bf16.gmra.mrb[0].mxu0 %v261
    %v735 = vpop.f32.mrb[0].mxu0
    %v736 = vadd.f32 %v123, %v735
    %v737 = vpop.f32.mrb[0].mxu0
    %v738 = vadd.f32 %v127, %v737
    %v739 = vpop.f32.mrb[0].mxu0
    %v740 = vadd.f32 %v123, %v739
    %v741 = vpop.f32.mrb[0].mxu0
    %v742 = vadd.f32 %v127, %v741
    %743 = vdwg.mxu0
    %744 = vmatprep.subr.bf16.mxu0 0
    %745 = vmatpush1.bf16.msra.mxu0 %v457
    %746 = vmatprep.subr.bf16.mxu0 0
    %747 = vmatpush1.bf16.msra.mxu0 %v460
    %748 = vmatprep.subr.bf16.mxu0 0
    %749 = vmatpush1.bf16.msra.mxu0 %v463
    %750 = vmatprep.subr.bf16.mxu0 0
    %751 = vmatpush1.bf16.msra.mxu0 %v466
    %752 = vmatprep.subr.bf16.mxu0 0
    %753 = vmatpush1.bf16.msra.mxu0 %v469
    %754 = vmatprep.subr.bf16.mxu0 0
    %755 = vmatpush1.bf16.msra.mxu0 %v472
    %756 = vmatprep.subr.bf16.mxu0 0
    %757 = vmatpush1.bf16.msra.mxu0 %v475
    %758 = vmatprep.subr.bf16.mxu0 0
    %759 = vmatpush1.bf16.msra.mxu0 %v478
    %760 = vmatprep.subr.bf16.mxu0 0
    %761 = vmatpush1.bf16.msra.mxu0 %v481
    %762 = vmatprep.subr.bf16.mxu0 0
    %763 = vmatpush1.bf16.msra.mxu0 %v484
    %764 = vmatprep.subr.bf16.mxu0 0
    %765 = vmatpush1.bf16.msra.mxu0 %v487
    %766 = vmatprep.subr.bf16.mxu0 0
    %767 = vmatpush1.bf16.msra.mxu0 %v490
    %768 = vmatprep.subr.bf16.mxu0 0
    %769 = vmatpush1.bf16.msra.mxu0 %v493
    %770 = vmatprep.subr.bf16.mxu0 0
    %771 = vmatpush1.bf16.msra.mxu0 %v496
    %772 = vmatprep.subr.bf16.mxu0 0
    %773 = vmatpush1.bf16.msra.mxu0 %v499
    %774 = vmatprep.subr.bf16.mxu0 0
    %775 = vmatpush1.bf16.msra.mxu0 %v502
    %776 = vmatprep.mubr.bf16.mxu0 %v232
    %777 = vmatmul.mubr.bf16.gmra.mrb[0].mxu0 %v231
    %v778 = vpop.f32.mrb[0].mxu0
    %v779 = vadd.f32 %v131, %v778
    %v780 = vpop.f32.mrb[0].mxu0
    %v781 = vpop.f32.mrb[0].mxu0
    %v782 = vadd.f32 %v131, %v781
    %v783 = vpop.f32.mrb[0].mxu0
    %784 = vmatprep.mubr.bf16.mxu0 %v234
    %785 = vmatmul.mubr.bf16.gmra.mrb[0].mxu0 %v233
    %v786 = vpop.f32.mrb[0].mxu0
    %v787 = vadd.f32 %v131, %v786
    %v788 = vpop.f32.mrb[0].mxu0
    %v789 = vpop.f32.mrb[0].mxu0
    %v790 = vadd.f32 %v131, %v789
    %v791 = vpop.f32.mrb[0].mxu0
    %792 = vmatprep.mubr.bf16.mxu0 %v236
    %793 = vmatmul.mubr.bf16.gmra.mrb[0].mxu0 %v235
    %v794 = vpop.f32.mrb[0].mxu0
    %v795 = vadd.f32 %v131, %v794
    %v796 = vpop.f32.mrb[0].mxu0
    %v797 = vpop.f32.mrb[0].mxu0
    %v798 = vadd.f32 %v131, %v797
    %v799 = vpop.f32.mrb[0].mxu0
    %800 = vmatprep.mubr.bf16.mxu0 %v238
    %801 = vmatmul.mubr.bf16.gmra.mrb[0].mxu0 %v237
    %v802 = vpop.f32.mrb[0].mxu0
    %v803 = vadd.f32 %v131, %v802
    %v804 = vpop.f32.mrb[0].mxu0
    %v805 = vpop.f32.mrb[0].mxu0
    %v806 = vadd.f32 %v131, %v805
    %v807 = vpop.f32.mrb[0].mxu0
    %808 = vmatprep.mubr.bf16.mxu0 %v240
    %809 = vmatmul.mubr.bf16.gmra.mrb[0].mxu0 %v239
    %v810 = vpop.f32.mrb[0].mxu0
    %v811 = vadd.f32 %v131, %v810
    %v812 = vpop.f32.mrb[0].mxu0
    %v813 = vpop.f32.mrb[0].mxu0
    %v814 = vadd.f32 %v131, %v813
    %v815 = vpop.f32.mrb[0].mxu0
    %816 = vmatprep.mubr.bf16.mxu0 %v242
    %817 = vmatmul.mubr.bf16.gmra.mrb[0].mxu0 %v241
    %v818 = vpop.f32.mrb[0].mxu0
    %v819 = vadd.f32 %v131, %v818
    %v820 = vpop.f32.mrb[0].mxu0
    %v821 = vpop.f32.mrb[0].mxu0
    %v822 = vadd.f32 %v131, %v821
    %v823 = vpop.f32.mrb[0].mxu0
    %824 = vmatprep.mubr.bf16.mxu0 %v244
    %825 = vmatmul.mubr.bf16.gmra.mrb[0].mxu0 %v243
    %v826 = vpop.f32.mrb[0].mxu0
    %v827 = vadd.f32 %v131, %v826
    %v828 = vpop.f32.mrb[0].mxu0
    %v829 = vpop.f32.mrb[0].mxu0
    %v830 = vadd.f32 %v131, %v829
    %v831 = vpop.f32.mrb[0].mxu0
    %832 = vmatprep.mubr.bf16.mxu0 %v246
    %833 = vmatmul.mubr.bf16.gmra.mrb[0].mxu0 %v245
    %v834 = vpop.f32.mrb[0].mxu0
    %v835 = vadd.f32 %v131, %v834
    %v836 = vpop.f32.mrb[0].mxu0
    %v837 = vpop.f32.mrb[0].mxu0
    %v838 = vadd.f32 %v131, %v837
    %v839 = vpop.f32.mrb[0].mxu0
    %840 = vmatprep.mubr.bf16.mxu0 %v248
    %841 = vmatmul.mubr.bf16.gmra.mrb[0].mxu0 %v247
    %v842 = vpop.f32.mrb[0].mxu0
    %v843 = vadd.f32 %v131, %v842
    %v844 = vpop.f32.mrb[0].mxu0
    %v845 = vpop.f32.mrb[0].mxu0
    %v846 = vadd.f32 %v131, %v845
    %v847 = vpop.f32.mrb[0].mxu0
    %848 = vmatprep.mubr.bf16.mxu0 %v250
    %849 = vmatmul.mubr.bf16.gmra.mrb[0].mxu0 %v249
    %v850 = vpop.f32.mrb[0].mxu0
    %v851 = vadd.f32 %v131, %v850
    %v852 = vpop.f32.mrb[0].mxu0
    %v853 = vpop.f32.mrb[0].mxu0
    %v854 = vadd.f32 %v131, %v853
    %v855 = vpop.f32.mrb[0].mxu0
    %856 = vmatprep.mubr.bf16.mxu0 %v252
    %857 = vmatmul.mubr.bf16.gmra.mrb[0].mxu0 %v251
    %v858 = vpop.f32.mrb[0].mxu0
    %v859 = vadd.f32 %v131, %v858
    %v860 = vpop.f32.mrb[0].mxu0
    %v861 = vpop.f32.mrb[0].mxu0
    %v862 = vadd.f32 %v131, %v861
    %v863 = vpop.f32.mrb[0].mxu0
    %864 = vmatprep.mubr.bf16.mxu0 %v254
    %865 = vmatmul.mubr.bf16.gmra.mrb[0].mxu0 %v253
    %v866 = vpop.f32.mrb[0].mxu0
    %v867 = vadd.f32 %v131, %v866
    %v868 = vpop.f32.mrb[0].mxu0
    %v869 = vpop.f32.mrb[0].mxu0
    %v870 = vadd.f32 %v131, %v869
    %v871 = vpop.f32.mrb[0].mxu0
    %872 = vmatprep.mubr.bf16.mxu0 %v256
    %873 = vmatmul.mubr.bf16.gmra.mrb[0].mxu0 %v255
    %v874 = vpop.f32.mrb[0].mxu0
    %v875 = vadd.f32 %v131, %v874
    %v876 = vpop.f32.mrb[0].mxu0
    %v877 = vpop.f32.mrb[0].mxu0
    %v878 = vadd.f32 %v131, %v877
    %v879 = vpop.f32.mrb[0].mxu0
    %880 = vmatprep.mubr.bf16.mxu0 %v258
    %881 = vmatmul.mubr.bf16.gmra.mrb[0].mxu0 %v257
    %v882 = vpop.f32.mrb[0].mxu0
    %v883 = vadd.f32 %v131, %v882
    %v884 = vpop.f32.mrb[0].mxu0
    %v885 = vpop.f32.mrb[0].mxu0
    %v886 = vadd.f32 %v131, %v885
    %v887 = vpop.f32.mrb[0].mxu0
    %888 = vmatprep.mubr.bf16.mxu0 %v260
    %889 = vmatmul.mubr.bf16.gmra.mrb[0].mxu0 %v259
    %v890 = vpop.f32.mrb[0].mxu0
    %v891 = vadd.f32 %v131, %v890
    %v892 = vpop.f32.mrb[0].mxu0
    %v893 = vpop.f32.mrb[0].mxu0
    %v894 = vadd.f32 %v131, %v893
    %v895 = vpop.f32.mrb[0].mxu0
    %896 = vmatprep.mubr.bf16.mxu0 %v262
    %897 = vmatmul.mubr.bf16.gmra.mrb[0].mxu0 %v261
    %v898 = vpop.f32.mrb[0].mxu0
    %v899 = vadd.f32 %v131, %v898
    %v900 = vpop.f32.mrb[0].mxu0
    %v901 = vpop.f32.mrb[0].mxu0
    %v902 = vadd.f32 %v131, %v901
    %v903 = vpop.f32.mrb[0].mxu0
    %904 = vdwg.mxu0
    %v905 = vmax.f32 %v586, 0.0
    %v906 = vmax.f32 %v588, 0.0
    %v907 = vmax.f32 %v590, 0.0
    %v908 = vmax.f32 %v592, 0.0
    %v909 = vmax.f32 %v596, 0.0
    %v910 = vmax.f32 %v598, 0.0
    %v911 = vmax.f32 %v600, 0.0
    %v912 = vmax.f32 %v602, 0.0
    %v913 = vmax.f32 %v606, 0.0
    %v914 = vmax.f32 %v608, 0.0
    %v915 = vmax.f32 %v610, 0.0
    %v916 = vmax.f32 %v612, 0.0
    %v917 = vmax.f32 %v616, 0.0
    %v918 = vmax.f32 %v618, 0.0
    %v919 = vmax.f32 %v620, 0.0
    %v920 = vmax.f32 %v622, 0.0
    %v921 = vmax.f32 %v626, 0.0
    %v922 = vmax.f32 %v628, 0.0
    %v923 = vmax.f32 %v630, 0.0
    %v924 = vmax.f32 %v632, 0.0
    %v925 = vmax.f32 %v636, 0.0
    %v926 = vmax.f32 %v638, 0.0
    %v927 = vmax.f32 %v640, 0.0
    %v928 = vmax.f32 %v642, 0.0
    %v929 = vmax.f32 %v646, 0.0
    %v930 = vmax.f32 %v648, 0.0
    %v931 = vmax.f32 %v650, 0.0
    %v932 = vmax.f32 %v652, 0.0
    %v933 = vmax.f32 %v656, 0.0
    %v934 = vmax.f32 %v658, 0.0
    %v935 = vmax.f32 %v660, 0.0
    %v936 = vmax.f32 %v662, 0.0
    %v937 = vmax.f32 %v666, 0.0
    %v938 = vmax.f32 %v668, 0.0
    %v939 = vmax.f32 %v670, 0.0
    %v940 = vmax.f32 %v672, 0.0
    %v941 = vmax.f32 %v676, 0.0
    %v942 = vmax.f32 %v678, 0.0
    %v943 = vmax.f32 %v680, 0.0
    %v944 = vmax.f32 %v682, 0.0
    %v945 = vmax.f32 %v686, 0.0
    %v946 = vmax.f32 %v688, 0.0
    %v947 = vmax.f32 %v690, 0.0
    %v948 = vmax.f32 %v692, 0.0
    %v949 = vmax.f32 %v696, 0.0
    %v950 = vmax.f32 %v698, 0.0
    %v951 = vmax.f32 %v700, 0.0
    %v952 = vmax.f32 %v702, 0.0
    %v953 = vmax.f32 %v706, 0.0
    %v954 = vmax.f32 %v708, 0.0
    %v955 = vmax.f32 %v710, 0.0
    %v956 = vmax.f32 %v712, 0.0
    %v957 = vmax.f32 %v716, 0.0
    %v958 = vmax.f32 %v718, 0.0
    %v959 = vmax.f32 %v720, 0.0
    %v960 = vmax.f32 %v722, 0.0
    %v961 = vmax.f32 %v726, 0.0
    %v962 = vmax.f32 %v728, 0.0
    %v963 = vmax.f32 %v730, 0.0
    %v964 = vmax.f32 %v732, 0.0
    %v965 = vmax.f32 %v736, 0.0
    %v966 = vmax.f32 %v738, 0.0
    %v967 = vmax.f32 %v740, 0.0
    %v968 = vmax.f32 %v742, 0.0
    %v969 = vpack.c.bf16 %v907, %v905
    %v970 = vpack.c.bf16 %v908, %v906
    %v971 = vpack.c.bf16 %v911, %v909
    %v972 = vpack.c.bf16 %v912, %v910
    %v973 = vpack.c.bf16 %v915, %v913
    %v974 = vpack.c.bf16 %v916, %v914
    %v975 = vpack.c.bf16 %v919, %v917
    %v976 = vpack.c.bf16 %v920, %v918
    %v977 = vpack.c.bf16 %v923, %v921
    %v978 = vpack.c.bf16 %v924, %v922
    %v979 = vpack.c.bf16 %v927, %v925
    %v980 = vpack.c.bf16 %v928, %v926
    %v981 = vpack.c.bf16 %v931, %v929
    %v982 = vpack.c.bf16 %v932, %v930
    %v983 = vpack.c.bf16 %v935, %v933
    %v984 = vpack.c.bf16 %v936, %v934
    %v985 = vpack.c.bf16 %v939, %v937
    %v986 = vpack.c.bf16 %v940, %v938
    %v987 = vpack.c.bf16 %v943, %v941
    %v988 = vpack.c.bf16 %v944, %v942
    %v989 = vpack.c.bf16 %v947, %v945
    %v990 = vpack.c.bf16 %v948, %v946
    %v991 = vpack.c.bf16 %v951, %v949
    %v992 = vpack.c.bf16 %v952, %v950
    %v993 = vpack.c.bf16 %v955, %v953
    %v994 = vpack.c.bf16 %v956, %v954
    %v995 = vpack.c.bf16 %v959, %v957
    %v996 = vpack.c.bf16 %v960, %v958
    %v997 = vpack.c.bf16 %v963, %v961
    %v998 = vpack.c.bf16 %v964, %v962
    %v999 = vpack.c.bf16 %v967, %v965
    %v1000 = vpack.c.bf16 %v968, %v966
    %v1001 = vld [vmem:[%s3] sm:$0xff]
    %v1002 = vld [vmem:[%s3 + $0x8] sm:$0xff]
    %v1003 = vld [vmem:[%s3 + $0x10] sm:$0xff]
    %v1004 = vld [vmem:[%s3 + $0x18] sm:$0xff]
    %v1005 = vld [vmem:[%s3 + $0x20] sm:$0xff]
    %v1006 = vld [vmem:[%s3 + $0x28] sm:$0xff]
    %v1007 = vld [vmem:[%s3 + $0x30] sm:$0xff]
    %v1008 = vld [vmem:[%s3 + $0x38] sm:$0xff]
    %v1009 = vld [vmem:[%s3 + $0x40] sm:$0xff]
    %v1010 = vld [vmem:[%s3 + $0x48] sm:$0xff]
    %v1011 = vld [vmem:[%s3 + $0x50] sm:$0xff]
    %v1012 = vld [vmem:[%s3 + $0x58] sm:$0xff]
    %v1013 = vld [vmem:[%s3 + $0x60] sm:$0xff]
    %v1014 = vld [vmem:[%s3 + $0x68] sm:$0xff]
    %v1015 = vld [vmem:[%s3 + $0x70] sm:$0xff]
    %v1016 = vld [vmem:[%s3 + $0x78] sm:$0xff]
    %v1017 = vld [vmem:[%s3 + $0x80] sm:$0xff]
    %v1018 = vld [vmem:[%s3 + $0x88] sm:$0xff]
    %v1019 = vld [vmem:[%s3 + $0x90] sm:$0xff]
    %v1020 = vld [vmem:[%s3 + $0x98] sm:$0xff]
    %v1021 = vld [vmem:[%s3 + $0xa0] sm:$0xff]
    %v1022 = vld [vmem:[%s3 + $0xa8] sm:$0xff]
    %v1023 = vld [vmem:[%s3 + $0xb0] sm:$0xff]
    %v1024 = vld [vmem:[%s3 + $0xb8] sm:$0xff]
    %v1025 = vld [vmem:[%s3 + $0xc0] sm:$0xff]
    %v1026 = vld [vmem:[%s3 + $0xc8] sm:$0xff]
    %v1027 = vld [vmem:[%s3 + $0xd0] sm:$0xff]
    %v1028 = vld [vmem:[%s3 + $0xd8] sm:$0xff]
    %v1029 = vld [vmem:[%s3 + $0xe0] sm:$0xff]
    %v1030 = vld [vmem:[%s3 + $0xe8] sm:$0xff]
    %v1031 = vld [vmem:[%s3 + $0xf0] sm:$0xff]
    %v1032 = vld [vmem:[%s3 + $0xf8] sm:$0xff]
    %v1033 = vld [vmem:[%s4] sm:$0x3]
    %v1035 = vlaneseq
    %v1036 = vshrl.u32 %v1035, 7
    %v1037 = vsub.s32 0, %v1036
    %v1038 = vrot.slane %v1033, %v1037
    %v1039 = vlaneseq
    %v1040 = vshrl.u32 %v1039, 7
    %v1041 = vsub.s32 1, %v1040
    %v1042 = vrot.slane %v1033, %v1041
    %v1077 = vunpack.c.l.b16 %v1001
    %v1078 = vunpack.c.h.b16 %v1001
    %v1079 = vunpack.c.l.b16 %v1002
    %v1080 = vunpack.c.h.b16 %v1002
    %v1081 = vunpack.c.l.b16 %v1003
    %v1082 = vunpack.c.h.b16 %v1003
    %v1083 = vunpack.c.l.b16 %v1004
    %v1084 = vunpack.c.h.b16 %v1004
    %v1085 = vunpack.c.l.b16 %v1005
    %v1086 = vunpack.c.h.b16 %v1005
    %v1087 = vunpack.c.l.b16 %v1006
    %v1088 = vunpack.c.h.b16 %v1006
    %v1089 = vunpack.c.l.b16 %v1007
    %v1090 = vunpack.c.h.b16 %v1007
    %v1091 = vunpack.c.l.b16 %v1008
    %v1092 = vunpack.c.h.b16 %v1008
    %v1093 = vunpack.c.l.b16 %v1009
    %v1094 = vunpack.c.h.b16 %v1009
    %v1095 = vunpack.c.l.b16 %v1010
    %v1096 = vunpack.c.h.b16 %v1010
    %v1097 = vunpack.c.l.b16 %v1011
    %v1098 = vunpack.c.h.b16 %v1011
    %v1099 = vunpack.c.l.b16 %v1012
    %v1100 = vunpack.c.h.b16 %v1012
    %v1101 = vunpack.c.l.b16 %v1013
    %v1102 = vunpack.c.h.b16 %v1013
    %v1103 = vunpack.c.l.b16 %v1014
    %v1104 = vunpack.c.h.b16 %v1014
    %v1105 = vunpack.c.l.b16 %v1015
    %v1106 = vunpack.c.h.b16 %v1015
    %v1107 = vunpack.c.l.b16 %v1016
    %v1108 = vunpack.c.h.b16 %v1016
    %v1109 = vunpack.c.l.b16 %v1017
    %v1110 = vunpack.c.h.b16 %v1017
    %v1111 = vunpack.c.l.b16 %v1018
    %v1112 = vunpack.c.h.b16 %v1018
    %v1113 = vunpack.c.l.b16 %v1019
    %v1114 = vunpack.c.h.b16 %v1019
    %v1115 = vunpack.c.l.b16 %v1020
    %v1116 = vunpack.c.h.b16 %v1020
    %v1117 = vunpack.c.l.b16 %v1021
    %v1118 = vunpack.c.h.b16 %v1021
    %v1119 = vunpack.c.l.b16 %v1022
    %v1120 = vunpack.c.h.b16 %v1022
    %v1121 = vunpack.c.l.b16 %v1023
    %v1122 = vunpack.c.h.b16 %v1023
    %v1123 = vunpack.c.l.b16 %v1024
    %v1124 = vunpack.c.h.b16 %v1024
    %v1125 = vunpack.c.l.b16 %v1025
    %v1126 = vunpack.c.h.b16 %v1025
    %v1127 = vunpack.c.l.b16 %v1026
    %v1128 = vunpack.c.h.b16 %v1026
    %v1129 = vunpack.c.l.b16 %v1027
    %v1130 = vunpack.c.h.b16 %v1027
    %v1131 = vunpack.c.l.b16 %v1028
    %v1132 = vunpack.c.h.b16 %v1028
    %v1133 = vunpack.c.l.b16 %v1029
    %v1134 = vunpack.c.h.b16 %v1029
    %v1135 = vunpack.c.l.b16 %v1030
    %v1136 = vunpack.c.h.b16 %v1030
    %v1137 = vunpack.c.l.b16 %v1031
    %v1138 = vunpack.c.h.b16 %v1031
    %v1139 = vunpack.c.l.b16 %v1032
    %v1140 = vunpack.c.h.b16 %v1032
    %v1141 = vpack.c.b16 %v1079, %v1077
    %v1142 = vpack.c.b16 %v1080, %v1078
    %v1143 = vpack.c.b16 %v1083, %v1081
    %v1144 = vpack.c.b16 %v1084, %v1082
    %v1145 = vpack.c.b16 %v1087, %v1085
    %v1146 = vpack.c.b16 %v1088, %v1086
    %v1147 = vpack.c.b16 %v1091, %v1089
    %v1148 = vpack.c.b16 %v1092, %v1090
    %v1149 = vpack.c.b16 %v1095, %v1093
    %v1150 = vpack.c.b16 %v1096, %v1094
    %v1151 = vpack.c.b16 %v1099, %v1097
    %v1152 = vpack.c.b16 %v1100, %v1098
    %v1153 = vpack.c.b16 %v1103, %v1101
    %v1154 = vpack.c.b16 %v1104, %v1102
    %v1155 = vpack.c.b16 %v1107, %v1105
    %v1156 = vpack.c.b16 %v1108, %v1106
    %v1157 = vpack.c.b16 %v1111, %v1109
    %v1158 = vpack.c.b16 %v1112, %v1110
    %v1159 = vpack.c.b16 %v1115, %v1113
    %v1160 = vpack.c.b16 %v1116, %v1114
    %v1161 = vpack.c.b16 %v1119, %v1117
    %v1162 = vpack.c.b16 %v1120, %v1118
    %v1163 = vpack.c.b16 %v1123, %v1121
    %v1164 = vpack.c.b16 %v1124, %v1122
    %v1165 = vpack.c.b16 %v1127, %v1125
    %v1166 = vpack.c.b16 %v1128, %v1126
    %v1167 = vpack.c.b16 %v1131, %v1129
    %v1168 = vpack.c.b16 %v1132, %v1130
    %v1169 = vpack.c.b16 %v1135, %v1133
    %v1170 = vpack.c.b16 %v1136, %v1134
    %v1171 = vpack.c.b16 %v1139, %v1137
    %v1172 = vpack.c.b16 %v1140, %v1138
    %1205 = vmatprep.subr.bf16.mxu0 %v1142
    %1206 = vmatpush1.bf16.msra.mxu0 %v1141
    %1207 = vmatprep.subr.bf16.mxu0 %v1144
    %1208 = vmatpush1.bf16.msra.mxu0 %v1143
    %1209 = vmatprep.subr.bf16.mxu0 %v1146
    %1210 = vmatpush1.bf16.msra.mxu0 %v1145
    %1211 = vmatprep.subr.bf16.mxu0 %v1148
    %1212 = vmatpush1.bf16.msra.mxu0 %v1147
    %1213 = vmatprep.subr.bf16.mxu0 %v1150
    %1214 = vmatpush1.bf16.msra.mxu0 %v1149
    %1215 = vmatprep.subr.bf16.mxu0 %v1152
    %1216 = vmatpush1.bf16.msra.mxu0 %v1151
    %1217 = vmatprep.subr.bf16.mxu0 %v1154
    %1218 = vmatpush1.bf16.msra.mxu0 %v1153
    %1219 = vmatprep.subr.bf16.mxu0 %v1156
    %1220 = vmatpush1.bf16.msra.mxu0 %v1155
    %1221 = vmatprep.subr.bf16.mxu0 %v1158
    %1222 = vmatpush1.bf16.msra.mxu0 %v1157
    %1223 = vmatprep.subr.bf16.mxu0 %v1160
    %1224 = vmatpush1.bf16.msra.mxu0 %v1159
    %1225 = vmatprep.subr.bf16.mxu0 %v1162
    %1226 = vmatpush1.bf16.msra.mxu0 %v1161
    %1227 = vmatprep.subr.bf16.mxu0 %v1164
    %1228 = vmatpush1.bf16.msra.mxu0 %v1163
    %1229 = vmatprep.subr.bf16.mxu0 %v1166
    %1230 = vmatpush1.bf16.msra.mxu0 %v1165
    %1231 = vmatprep.subr.bf16.mxu0 %v1168
    %1232 = vmatpush1.bf16.msra.mxu0 %v1167
    %1233 = vmatprep.subr.bf16.mxu0 %v1170
    %1234 = vmatpush1.bf16.msra.mxu0 %v1169
    %1235 = vmatprep.subr.bf16.mxu0 %v1172
    %1236 = vmatpush1.bf16.msra.mxu0 %v1171
    %1237 = vmatprep.mubr.bf16.mxu0 %v970
    %1238 = vmatmul.mubr.bf16.gmra.mrb[0].mxu0 %v969
    %v1239 = vpop.f32.mrb[0].mxu0
    %v1240 = vadd.f32 %v1038, %v1239
    %v1241 = vpop.f32.mrb[0].mxu0
    %v1242 = vadd.f32 %v1042, %v1241
    %v1243 = vpop.f32.mrb[0].mxu0
    %v1244 = vadd.f32 %v1038, %v1243
    %v1245 = vpop.f32.mrb[0].mxu0
    %v1246 = vadd.f32 %v1042, %v1245
    %1247 = vmatprep.mubr.bf16.mxu0 %v972
    %1248 = vmatmul.mubr.bf16.gmra.mrb[0].mxu0 %v971
    %v1249 = vpop.f32.mrb[0].mxu0
    %v1250 = vadd.f32 %v1038, %v1249
    %v1251 = vpop.f32.mrb[0].mxu0
    %v1252 = vadd.f32 %v1042, %v1251
    %v1253 = vpop.f32.mrb[0].mxu0
    %v1254 = vadd.f32 %v1038, %v1253
    %v1255 = vpop.f32.mrb[0].mxu0
    %v1256 = vadd.f32 %v1042, %v1255
    %1257 = vmatprep.mubr.bf16.mxu0 %v974
    %1258 = vmatmul.mubr.bf16.gmra.mrb[0].mxu0 %v973
    %v1259 = vpop.f32.mrb[0].mxu0
    %v1260 = vadd.f32 %v1038, %v1259
    %v1261 = vpop.f32.mrb[0].mxu0
    %v1262 = vadd.f32 %v1042, %v1261
    %v1263 = vpop.f32.mrb[0].mxu0
    %v1264 = vadd.f32 %v1038, %v1263
    %v1265 = vpop.f32.mrb[0].mxu0
    %v1266 = vadd.f32 %v1042, %v1265
    %1267 = vmatprep.mubr.bf16.mxu0 %v976
    %1268 = vmatmul.mubr.bf16.gmra.mrb[0].mxu0 %v975
    %v1269 = vpop.f32.mrb[0].mxu0
    %v1270 = vadd.f32 %v1038, %v1269
    %v1271 = vpop.f32.mrb[0].mxu0
    %v1272 = vadd.f32 %v1042, %v1271
    %v1273 = vpop.f32.mrb[0].mxu0
    %v1274 = vadd.f32 %v1038, %v1273
    %v1275 = vpop.f32.mrb[0].mxu0
    %v1276 = vadd.f32 %v1042, %v1275
    %1277 = vmatprep.mubr.bf16.mxu0 %v978
    %1278 = vmatmul.mubr.bf16.gmra.mrb[0].mxu0 %v977
    %v1279 = vpop.f32.mrb[0].mxu0
    %v1280 = vadd.f32 %v1038, %v1279
    %v1281 = vpop.f32.mrb[0].mxu0
    %v1282 = vadd.f32 %v1042, %v1281
    %v1283 = vpop.f32.mrb[0].mxu0
    %v1284 = vadd.f32 %v1038, %v1283
    %v1285 = vpop.f32.mrb[0].mxu0
    %v1286 = vadd.f32 %v1042, %v1285
    %1287 = vmatprep.mubr.bf16.mxu0 %v980
    %1288 = vmatmul.mubr.bf16.gmra.mrb[0].mxu0 %v979
    %v1289 = vpop.f32.mrb[0].mxu0
    %v1290 = vadd.f32 %v1038, %v1289
    %v1291 = vpop.f32.mrb[0].mxu0
    %v1292 = vadd.f32 %v1042, %v1291
    %v1293 = vpop.f32.mrb[0].mxu0
    %v1294 = vadd.f32 %v1038, %v1293
    %v1295 = vpop.f32.mrb[0].mxu0
    %v1296 = vadd.f32 %v1042, %v1295
    %1297 = vmatprep.mubr.bf16.mxu0 %v982
    %1298 = vmatmul.mubr.bf16.gmra.mrb[0].mxu0 %v981
    %v1299 = vpop.f32.mrb[0].mxu0
    %v1300 = vadd.f32 %v1038, %v1299
    %v1301 = vpop.f32.mrb[0].mxu0
    %v1302 = vadd.f32 %v1042, %v1301
    %v1303 = vpop.f32.mrb[0].mxu0
    %v1304 = vadd.f32 %v1038, %v1303
    %v1305 = vpop.f32.mrb[0].mxu0
    %v1306 = vadd.f32 %v1042, %v1305
    %1307 = vmatprep.mubr.bf16.mxu0 %v984
    %1308 = vmatmul.mubr.bf16.gmra.mrb[0].mxu0 %v983
    %v1309 = vpop.f32.mrb[0].mxu0
    %v1310 = vadd.f32 %v1038, %v1309
    %v1311 = vpop.f32.mrb[0].mxu0
    %v1312 = vadd.f32 %v1042, %v1311
    %v1313 = vpop.f32.mrb[0].mxu0
    %v1314 = vadd.f32 %v1038, %v1313
    %v1315 = vpop.f32.mrb[0].mxu0
    %v1316 = vadd.f32 %v1042, %v1315
    %1317 = vmatprep.mubr.bf16.mxu0 %v986
    %1318 = vmatmul.mubr.bf16.gmra.mrb[0].mxu0 %v985
    %v1319 = vpop.f32.mrb[0].mxu0
    %v1320 = vadd.f32 %v1038, %v1319
    %v1321 = vpop.f32.mrb[0].mxu0
    %v1322 = vadd.f32 %v1042, %v1321
    %v1323 = vpop.f32.mrb[0].mxu0
    %v1324 = vadd.f32 %v1038, %v1323
    %v1325 = vpop.f32.mrb[0].mxu0
    %v1326 = vadd.f32 %v1042, %v1325
    %1327 = vmatprep.mubr.bf16.mxu0 %v988
    %1328 = vmatmul.mubr.bf16.gmra.mrb[0].mxu0 %v987
    %v1329 = vpop.f32.mrb[0].mxu0
    %v1330 = vadd.f32 %v1038, %v1329
    %v1331 = vpop.f32.mrb[0].mxu0
    %v1332 = vadd.f32 %v1042, %v1331
    %v1333 = vpop.f32.mrb[0].mxu0
    %v1334 = vadd.f32 %v1038, %v1333
    %v1335 = vpop.f32.mrb[0].mxu0
    %v1336 = vadd.f32 %v1042, %v1335
    %1337 = vmatprep.mubr.bf16.mxu0 %v990
    %1338 = vmatmul.mubr.bf16.gmra.mrb[0].mxu0 %v989
    %v1339 = vpop.f32.mrb[0].mxu0
    %v1340 = vadd.f32 %v1038, %v1339
    %v1341 = vpop.f32.mrb[0].mxu0
    %v1342 = vadd.f32 %v1042, %v1341
    %v1343 = vpop.f32.mrb[0].mxu0
    %v1344 = vadd.f32 %v1038, %v1343
    %v1345 = vpop.f32.mrb[0].mxu0
    %v1346 = vadd.f32 %v1042, %v1345
    %1347 = vmatprep.mubr.bf16.mxu0 %v992
    %1348 = vmatmul.mubr.bf16.gmra.mrb[0].mxu0 %v991
    %v1349 = vpop.f32.mrb[0].mxu0
    %v1350 = vadd.f32 %v1038, %v1349
    %v1351 = vpop.f32.mrb[0].mxu0
    %v1352 = vadd.f32 %v1042, %v1351
    %v1353 = vpop.f32.mrb[0].mxu0
    %v1354 = vadd.f32 %v1038, %v1353
    %v1355 = vpop.f32.mrb[0].mxu0
    %v1356 = vadd.f32 %v1042, %v1355
    %1357 = vmatprep.mubr.bf16.mxu0 %v994
    %1358 = vmatmul.mubr.bf16.gmra.mrb[0].mxu0 %v993
    %v1359 = vpop.f32.mrb[0].mxu0
    %v1360 = vadd.f32 %v1038, %v1359
    %v1361 = vpop.f32.mrb[0].mxu0
    %v1362 = vadd.f32 %v1042, %v1361
    %v1363 = vpop.f32.mrb[0].mxu0
    %v1364 = vadd.f32 %v1038, %v1363
    %v1365 = vpop.f32.mrb[0].mxu0
    %v1366 = vadd.f32 %v1042, %v1365
    %1367 = vmatprep.mubr.bf16.mxu0 %v996
    %1368 = vmatmul.mubr.bf16.gmra.mrb[0].mxu0 %v995
    %v1369 = vpop.f32.mrb[0].mxu0
    %v1370 = vadd.f32 %v1038, %v1369
    %v1371 = vpop.f32.mrb[0].mxu0
    %v1372 = vadd.f32 %v1042, %v1371
    %v1373 = vpop.f32.mrb[0].mxu0
    %v1374 = vadd.f32 %v1038, %v1373
    %v1375 = vpop.f32.mrb[0].mxu0
    %v1376 = vadd.f32 %v1042, %v1375
    %1377 = vmatprep.mubr.bf16.mxu0 %v998
    %1378 = vmatmul.mubr.bf16.gmra.mrb[0].mxu0 %v997
    %v1379 = vpop.f32.mrb[0].mxu0
    %v1380 = vadd.f32 %v1038, %v1379
    %v1381 = vpop.f32.mrb[0].mxu0
    %v1382 = vadd.f32 %v1042, %v1381
    %v1383 = vpop.f32.mrb[0].mxu0
    %v1384 = vadd.f32 %v1038, %v1383
    %v1385 = vpop.f32.mrb[0].mxu0
    %v1386 = vadd.f32 %v1042, %v1385
    %1387 = vmatprep.mubr.bf16.mxu0 %v1000
    %1388 = vmatmul.mubr.bf16.gmra.mrb[0].mxu0 %v999
    %v1389 = vpop.f32.mrb[0].mxu0
    %v1390 = vadd.f32 %v1038, %v1389
    %v1391 = vpop.f32.mrb[0].mxu0
    %v1392 = vadd.f32 %v1042, %v1391
    %v1393 = vpop.f32.mrb[0].mxu0
    %v1394 = vadd.f32 %v1038, %v1393
    %v1395 = vpop.f32.mrb[0].mxu0
    %v1396 = vadd.f32 %v1042, %v1395
    %1397 = vdwg.mxu0
    %v1398 = vmul.f32 %v1240, %v1240
    %v1399 = vmul.f32 %v1244, %v1244
    %v1400 = vmul.f32 %v1250, %v1250
    %v1401 = vmul.f32 %v1254, %v1254
    %v1402 = vmul.f32 %v1260, %v1260
    %v1403 = vmul.f32 %v1264, %v1264
    %v1404 = vmul.f32 %v1270, %v1270
    %v1405 = vmul.f32 %v1274, %v1274
    %v1406 = vmul.f32 %v1280, %v1280
    %v1407 = vmul.f32 %v1284, %v1284
    %v1408 = vmul.f32 %v1290, %v1290
    %v1409 = vmul.f32 %v1294, %v1294
    %v1410 = vmul.f32 %v1300, %v1300
    %v1411 = vmul.f32 %v1304, %v1304
    %v1412 = vmul.f32 %v1310, %v1310
    %v1413 = vmul.f32 %v1314, %v1314
    %v1414 = vmul.f32 %v1320, %v1320
    %v1415 = vmul.f32 %v1324, %v1324
    %v1416 = vmul.f32 %v1330, %v1330
    %v1417 = vmul.f32 %v1334, %v1334
    %v1418 = vmul.f32 %v1340, %v1340
    %v1419 = vmul.f32 %v1344, %v1344
    %v1420 = vmul.f32 %v1350, %v1350
    %v1421 = vmul.f32 %v1354, %v1354
    %v1422 = vmul.f32 %v1360, %v1360
    %v1423 = vmul.f32 %v1364, %v1364
    %v1424 = vmul.f32 %v1370, %v1370
    %v1425 = vmul.f32 %v1374, %v1374
    %v1426 = vmul.f32 %v1380, %v1380
    %v1427 = vmul.f32 %v1384, %v1384
    %v1428 = vmul.f32 %v1390, %v1390
    %v1429 = vmul.f32 %v1394, %v1394
    %1430 = vadd.xlane.f32.xlu0 %v1398
    %v1431 = vpop.xlane.xlu0 %1430
    %1432 = vadd.xlane.f32.xlu0 %v1399
    %v1433 = vpop.xlane.xlu0 %1432
    %1434 = vadd.xlane.f32.xlu0 %v1400
    %v1435 = vpop.xlane.xlu0 %1434
    %1436 = vadd.xlane.f32.xlu0 %v1401
    %v1437 = vpop.xlane.xlu0 %1436
    %1438 = vadd.xlane.f32.xlu0 %v1402
    %v1439 = vpop.xlane.xlu0 %1438
    %1440 = vadd.xlane.f32.xlu0 %v1403
    %v1441 = vpop.xlane.xlu0 %1440
    %1442 = vadd.xlane.f32.xlu0 %v1404
    %v1443 = vpop.xlane.xlu0 %1442
    %1444 = vadd.xlane.f32.xlu0 %v1405
    %v1445 = vpop.xlane.xlu0 %1444
    %1446 = vadd.xlane.f32.xlu0 %v1406
    %v1447 = vpop.xlane.xlu0 %1446
    %1448 = vadd.xlane.f32.xlu0 %v1407
    %v1449 = vpop.xlane.xlu0 %1448
    %1450 = vadd.xlane.f32.xlu0 %v1408
    %v1451 = vpop.xlane.xlu0 %1450
    %1452 = vadd.xlane.f32.xlu0 %v1409
    %v1453 = vpop.xlane.xlu0 %1452
    %1454 = vadd.xlane.f32.xlu0 %v1410
    %v1455 = vpop.xlane.xlu0 %1454
    %1456 = vadd.xlane.f32.xlu0 %v1411
    %v1457 = vpop.xlane.xlu0 %1456
    %1458 = vadd.xlane.f32.xlu0 %v1412
    %v1459 = vpop.xlane.xlu0 %1458
    %1460 = vadd.xlane.f32.xlu0 %v1413
    %v1461 = vpop.xlane.xlu0 %1460
    %1462 = vadd.xlane.f32.xlu0 %v1414
    %v1463 = vpop.xlane.xlu0 %1462
    %1464 = vadd.xlane.f32.xlu0 %v1415
    %v1465 = vpop.xlane.xlu0 %1464
    %1466 = vadd.xlane.f32.xlu0 %v1416
    %v1467 = vpop.xlane.xlu0 %1466
    %1468 = vadd.xlane.f32.xlu0 %v1417
    %v1469 = vpop.xlane.xlu0 %1468
    %1470 = vadd.xlane.f32.xlu0 %v1418
    %v1471 = vpop.xlane.xlu0 %1470
    %1472 = vadd.xlane.f32.xlu0 %v1419
    %v1473 = vpop.xlane.xlu0 %1472
    %1474 = vadd.xlane.f32.xlu0 %v1420
    %v1475 = vpop.xlane.xlu0 %1474
    %1476 = vadd.xlane.f32.xlu0 %v1421
    %v1477 = vpop.xlane.xlu0 %1476
    %1478 = vadd.xlane.f32.xlu0 %v1422
    %v1479 = vpop.xlane.xlu0 %1478
    %1480 = vadd.xlane.f32.xlu0 %v1423
    %v1481 = vpop.xlane.xlu0 %1480
    %1482 = vadd.xlane.f32.xlu0 %v1424
    %v1483 = vpop.xlane.xlu0 %1482
    %1484 = vadd.xlane.f32.xlu0 %v1425
    %v1485 = vpop.xlane.xlu0 %1484
    %1486 = vadd.xlane.f32.xlu0 %v1426
    %v1487 = vpop.xlane.xlu0 %1486
    %1488 = vadd.xlane.f32.xlu0 %v1427
    %v1489 = vpop.xlane.xlu0 %1488
    %1490 = vadd.xlane.f32.xlu0 %v1428
    %v1491 = vpop.xlane.xlu0 %1490
    %1492 = vadd.xlane.f32.xlu0 %v1429
    %v1493 = vpop.xlane.xlu0 %1492
    %v1494 = vadd.f32 %v1431, 1e-12
    %v1495 = vadd.f32 %v1433, 1e-12
    %v1496 = vadd.f32 %v1435, 1e-12
    %v1497 = vadd.f32 %v1437, 1e-12
    %v1498 = vadd.f32 %v1439, 1e-12
    %v1499 = vadd.f32 %v1441, 1e-12
    %v1500 = vadd.f32 %v1443, 1e-12
    %v1501 = vadd.f32 %v1445, 1e-12
    %v1502 = vadd.f32 %v1447, 1e-12
    %v1503 = vadd.f32 %v1449, 1e-12
    %v1504 = vadd.f32 %v1451, 1e-12
    %v1505 = vadd.f32 %v1453, 1e-12
    %v1506 = vadd.f32 %v1455, 1e-12
    %v1507 = vadd.f32 %v1457, 1e-12
    %v1508 = vadd.f32 %v1459, 1e-12
    %v1509 = vadd.f32 %v1461, 1e-12
    %v1510 = vadd.f32 %v1463, 1e-12
    %v1511 = vadd.f32 %v1465, 1e-12
    %v1512 = vadd.f32 %v1467, 1e-12
    %v1513 = vadd.f32 %v1469, 1e-12
    %v1514 = vadd.f32 %v1471, 1e-12
    %v1515 = vadd.f32 %v1473, 1e-12
    %v1516 = vadd.f32 %v1475, 1e-12
    %v1517 = vadd.f32 %v1477, 1e-12
    %v1518 = vadd.f32 %v1479, 1e-12
    %v1519 = vadd.f32 %v1481, 1e-12
    %v1520 = vadd.f32 %v1483, 1e-12
    %v1521 = vadd.f32 %v1485, 1e-12
    %v1522 = vadd.f32 %v1487, 1e-12
    %v1523 = vadd.f32 %v1489, 1e-12
    %v1524 = vadd.f32 %v1491, 1e-12
    %v1525 = vadd.f32 %v1493, 1e-12
    %v1526 = vrsqrt.pop %v1494
    %v1527 = vrsqrt.pop %v1495
    %v1528 = vrsqrt.pop %v1496
    %v1529 = vrsqrt.pop %v1497
    %v1530 = vrsqrt.pop %v1498
    %v1531 = vrsqrt.pop %v1499
    %v1532 = vrsqrt.pop %v1500
    %v1533 = vrsqrt.pop %v1501
    %v1534 = vrsqrt.pop %v1502
    %v1535 = vrsqrt.pop %v1503
    %v1536 = vrsqrt.pop %v1504
    %v1537 = vrsqrt.pop %v1505
    %v1538 = vrsqrt.pop %v1506
    %v1539 = vrsqrt.pop %v1507
    %v1540 = vrsqrt.pop %v1508
    %v1541 = vrsqrt.pop %v1509
    %v1542 = vrsqrt.pop %v1510
    %v1543 = vrsqrt.pop %v1511
    %v1544 = vrsqrt.pop %v1512
    %v1545 = vrsqrt.pop %v1513
    %v1546 = vrsqrt.pop %v1514
    %v1547 = vrsqrt.pop %v1515
    %v1548 = vrsqrt.pop %v1516
    %v1549 = vrsqrt.pop %v1517
    %v1550 = vrsqrt.pop %v1518
    %v1551 = vrsqrt.pop %v1519
    %v1552 = vrsqrt.pop %v1520
    %v1553 = vrsqrt.pop %v1521
    %v1554 = vrsqrt.pop %v1522
    %v1555 = vrsqrt.pop %v1523
    %v1556 = vrsqrt.pop %v1524
    %v1557 = vrsqrt.pop %v1525
    %v1558 = vmul.f32 %v1526, 10.0
    %v1559 = vmul.f32 %v1527, 10.0
    %v1560 = vmul.f32 %v1528, 10.0
    %v1561 = vmul.f32 %v1529, 10.0
    %v1562 = vmul.f32 %v1530, 10.0
    %v1563 = vmul.f32 %v1531, 10.0
    %v1564 = vmul.f32 %v1532, 10.0
    %v1565 = vmul.f32 %v1533, 10.0
    %v1566 = vmul.f32 %v1534, 10.0
    %v1567 = vmul.f32 %v1535, 10.0
    %v1568 = vmul.f32 %v1536, 10.0
    %v1569 = vmul.f32 %v1537, 10.0
    %v1570 = vmul.f32 %v1538, 10.0
    %v1571 = vmul.f32 %v1539, 10.0
    %v1572 = vmul.f32 %v1540, 10.0
    %v1573 = vmul.f32 %v1541, 10.0
    %v1574 = vmul.f32 %v1542, 10.0
    %v1575 = vmul.f32 %v1543, 10.0
    %v1576 = vmul.f32 %v1544, 10.0
    %v1577 = vmul.f32 %v1545, 10.0
    %v1578 = vmul.f32 %v1546, 10.0
    %v1579 = vmul.f32 %v1547, 10.0
    %v1580 = vmul.f32 %v1548, 10.0
    %v1581 = vmul.f32 %v1549, 10.0
    %v1582 = vmul.f32 %v1550, 10.0
    %v1583 = vmul.f32 %v1551, 10.0
    %v1584 = vmul.f32 %v1552, 10.0
    %v1585 = vmul.f32 %v1553, 10.0
    %v1586 = vmul.f32 %v1554, 10.0
    %v1587 = vmul.f32 %v1555, 10.0
    %v1588 = vmul.f32 %v1556, 10.0
    %v1589 = vmul.f32 %v1557, 10.0
    %v1590 = vmul.f32 %v1242, %v1558
    %v1591 = vmul.f32 %v1246, %v1559
    %v1592 = vmul.f32 %v1252, %v1560
    %v1593 = vmul.f32 %v1256, %v1561
    %v1594 = vmul.f32 %v1262, %v1562
    %v1595 = vmul.f32 %v1266, %v1563
    %v1596 = vmul.f32 %v1272, %v1564
    %v1597 = vmul.f32 %v1276, %v1565
    %v1598 = vmul.f32 %v1282, %v1566
    %v1599 = vmul.f32 %v1286, %v1567
    %v1600 = vmul.f32 %v1292, %v1568
    %v1601 = vmul.f32 %v1296, %v1569
    %v1602 = vmul.f32 %v1302, %v1570
    %v1603 = vmul.f32 %v1306, %v1571
    %v1604 = vmul.f32 %v1312, %v1572
    %v1605 = vmul.f32 %v1316, %v1573
    %v1606 = vmul.f32 %v1322, %v1574
    %v1607 = vmul.f32 %v1326, %v1575
    %v1608 = vmul.f32 %v1332, %v1576
    %v1609 = vmul.f32 %v1336, %v1577
    %v1610 = vmul.f32 %v1342, %v1578
    %v1611 = vmul.f32 %v1346, %v1579
    %v1612 = vmul.f32 %v1352, %v1580
    %v1613 = vmul.f32 %v1356, %v1581
    %v1614 = vmul.f32 %v1362, %v1582
    %v1615 = vmul.f32 %v1366, %v1583
    %v1616 = vmul.f32 %v1372, %v1584
    %v1617 = vmul.f32 %v1376, %v1585
    %v1618 = vmul.f32 %v1382, %v1586
    %v1619 = vmul.f32 %v1386, %v1587
    %v1620 = vmul.f32 %v1392, %v1588
    %v1621 = vmul.f32 %v1396, %v1589
    %1654 = vrot.lane.b32.xlu0 %v1590, 64
    %v1655 = vpop.permute.xlu0 %1654
    %1656 = vrot.lane.b32.xlu0 %v1591, 64
    %v1657 = vpop.permute.xlu0 %1656
    %1658 = vrot.lane.b32.xlu0 %v1592, 64
    %v1659 = vpop.permute.xlu0 %1658
    %1660 = vrot.lane.b32.xlu0 %v1593, 64
    %v1661 = vpop.permute.xlu0 %1660
    %1662 = vrot.lane.b32.xlu0 %v1594, 64
    %v1663 = vpop.permute.xlu0 %1662
    %1664 = vrot.lane.b32.xlu0 %v1595, 64
    %v1665 = vpop.permute.xlu0 %1664
    %1666 = vrot.lane.b32.xlu0 %v1596, 64
    %v1667 = vpop.permute.xlu0 %1666
    %1668 = vrot.lane.b32.xlu0 %v1597, 64
    %v1669 = vpop.permute.xlu0 %1668
    %1670 = vrot.lane.b32.xlu0 %v1598, 64
    %v1671 = vpop.permute.xlu0 %1670
    %1672 = vrot.lane.b32.xlu0 %v1599, 64
    %v1673 = vpop.permute.xlu0 %1672
    %1674 = vrot.lane.b32.xlu0 %v1600, 64
    %v1675 = vpop.permute.xlu0 %1674
    %1676 = vrot.lane.b32.xlu0 %v1601, 64
    %v1677 = vpop.permute.xlu0 %1676
    %1678 = vrot.lane.b32.xlu0 %v1602, 64
    %v1679 = vpop.permute.xlu0 %1678
    %1680 = vrot.lane.b32.xlu0 %v1603, 64
    %v1681 = vpop.permute.xlu0 %1680
    %1682 = vrot.lane.b32.xlu0 %v1604, 64
    %v1683 = vpop.permute.xlu0 %1682
    %1684 = vrot.lane.b32.xlu0 %v1605, 64
    %v1685 = vpop.permute.xlu0 %1684
    %1686 = vrot.lane.b32.xlu0 %v1606, 64
    %v1687 = vpop.permute.xlu0 %1686
    %1688 = vrot.lane.b32.xlu0 %v1607, 64
    %v1689 = vpop.permute.xlu0 %1688
    %1690 = vrot.lane.b32.xlu0 %v1608, 64
    %v1691 = vpop.permute.xlu0 %1690
    %1692 = vrot.lane.b32.xlu0 %v1609, 64
    %v1693 = vpop.permute.xlu0 %1692
    %1694 = vrot.lane.b32.xlu0 %v1610, 64
    %v1695 = vpop.permute.xlu0 %1694
    %1696 = vrot.lane.b32.xlu0 %v1611, 64
    %v1697 = vpop.permute.xlu0 %1696
    %1698 = vrot.lane.b32.xlu0 %v1612, 64
    %v1699 = vpop.permute.xlu0 %1698
    %1700 = vrot.lane.b32.xlu0 %v1613, 64
    %v1701 = vpop.permute.xlu0 %1700
    %1702 = vrot.lane.b32.xlu0 %v1614, 64
    %v1703 = vpop.permute.xlu0 %1702
    %1704 = vrot.lane.b32.xlu0 %v1615, 64
    %v1705 = vpop.permute.xlu0 %1704
    %1706 = vrot.lane.b32.xlu0 %v1616, 64
    %v1707 = vpop.permute.xlu0 %1706
    %1708 = vrot.lane.b32.xlu0 %v1617, 64
    %v1709 = vpop.permute.xlu0 %1708
    %1710 = vrot.lane.b32.xlu0 %v1618, 64
    %v1711 = vpop.permute.xlu0 %1710
    %1712 = vrot.lane.b32.xlu0 %v1619, 64
    %v1713 = vpop.permute.xlu0 %1712
    %1714 = vrot.lane.b32.xlu0 %v1620, 64
    %v1715 = vpop.permute.xlu0 %1714
    %1716 = vrot.lane.b32.xlu0 %v1621, 64
    %v1717 = vpop.permute.xlu0 %1716
    %vm1750 = vcmask 523264
    %v1751 = vsel %vm1750, %v779, %v1655
    %v1752 = vsel %vm1750, %v782, %v1657
    %v1753 = vsel %vm1750, %v787, %v1659
    %v1754 = vsel %vm1750, %v790, %v1661
    %v1755 = vsel %vm1750, %v795, %v1663
    %v1756 = vsel %vm1750, %v798, %v1665
    %v1757 = vsel %vm1750, %v803, %v1667
    %v1758 = vsel %vm1750, %v806, %v1669
    %v1759 = vsel %vm1750, %v811, %v1671
    %v1760 = vsel %vm1750, %v814, %v1673
    %v1761 = vsel %vm1750, %v819, %v1675
    %v1762 = vsel %vm1750, %v822, %v1677
    %v1763 = vsel %vm1750, %v827, %v1679
    %v1764 = vsel %vm1750, %v830, %v1681
    %v1765 = vsel %vm1750, %v835, %v1683
    %v1766 = vsel %vm1750, %v838, %v1685
    %v1767 = vsel %vm1750, %v843, %v1687
    %v1768 = vsel %vm1750, %v846, %v1689
    %v1769 = vsel %vm1750, %v851, %v1691
    %v1770 = vsel %vm1750, %v854, %v1693
    %v1771 = vsel %vm1750, %v859, %v1695
    %v1772 = vsel %vm1750, %v862, %v1697
    %v1773 = vsel %vm1750, %v867, %v1699
    %v1774 = vsel %vm1750, %v870, %v1701
    %v1775 = vsel %vm1750, %v875, %v1703
    %v1776 = vsel %vm1750, %v878, %v1705
    %v1777 = vsel %vm1750, %v883, %v1707
    %v1778 = vsel %vm1750, %v886, %v1709
    %v1779 = vsel %vm1750, %v891, %v1711
    %v1780 = vsel %vm1750, %v894, %v1713
    %v1781 = vsel %vm1750, %v899, %v1715
    %v1782 = vsel %vm1750, %v902, %v1717
    %1783 = vst [vmem:[#allocation2] sm:$0xff] %v1751
    %1784 = vst [vmem:[#allocation2 + $0x8] sm:$0xff] %v1752
    %1785 = vst [vmem:[#allocation2 + $0x10] sm:$0xff] %v1753
    %1786 = vst [vmem:[#allocation2 + $0x18] sm:$0xff] %v1754
    %1787 = vst [vmem:[#allocation2 + $0x20] sm:$0xff] %v1755
    %1788 = vst [vmem:[#allocation2 + $0x28] sm:$0xff] %v1756
    %1789 = vst [vmem:[#allocation2 + $0x30] sm:$0xff] %v1757
    %1790 = vst [vmem:[#allocation2 + $0x38] sm:$0xff] %v1758
    %1791 = vst [vmem:[#allocation2 + $0x40] sm:$0xff] %v1759
    %1792 = vst [vmem:[#allocation2 + $0x48] sm:$0xff] %v1760
    %1793 = vst [vmem:[#allocation2 + $0x50] sm:$0xff] %v1761
    %1794 = vst [vmem:[#allocation2 + $0x58] sm:$0xff] %v1762
    %1795 = vst [vmem:[#allocation2 + $0x60] sm:$0xff] %v1763
    %1796 = vst [vmem:[#allocation2 + $0x68] sm:$0xff] %v1764
    %1797 = vst [vmem:[#allocation2 + $0x70] sm:$0xff] %v1765
    %1798 = vst [vmem:[#allocation2 + $0x78] sm:$0xff] %v1766
    %1799 = vst [vmem:[#allocation2 + $0x80] sm:$0xff] %v1767
    %1800 = vst [vmem:[#allocation2 + $0x88] sm:$0xff] %v1768
    %1801 = vst [vmem:[#allocation2 + $0x90] sm:$0xff] %v1769
    %1802 = vst [vmem:[#allocation2 + $0x98] sm:$0xff] %v1770
    %1803 = vst [vmem:[#allocation2 + $0xa0] sm:$0xff] %v1771
    %1804 = vst [vmem:[#allocation2 + $0xa8] sm:$0xff] %v1772
    %1805 = vst [vmem:[#allocation2 + $0xb0] sm:$0xff] %v1773
    %1806 = vst [vmem:[#allocation2 + $0xb8] sm:$0xff] %v1774
    %1807 = vst [vmem:[#allocation2 + $0xc0] sm:$0xff] %v1775
    %1808 = vst [vmem:[#allocation2 + $0xc8] sm:$0xff] %v1776
    %1809 = vst [vmem:[#allocation2 + $0xd0] sm:$0xff] %v1777
    %1810 = vst [vmem:[#allocation2 + $0xd8] sm:$0xff] %v1778
    %1811 = vst [vmem:[#allocation2 + $0xe0] sm:$0xff] %v1779
    %1812 = vst [vmem:[#allocation2 + $0xe8] sm:$0xff] %v1780
    %1813 = vst [vmem:[#allocation2 + $0xf0] sm:$0xff] %v1781
    %1814 = vst [vmem:[#allocation2 + $0xf8] sm:$0xff] %v1782
    // Predicated region
    $region22: #{tpu_custom_call.1} parent=1 // pred_check
      _
    $region23: #{tpu_custom_call.1} parent=1 // pred_check_branch
      %1816 = sbr.rel (0) target = $region25
    $region24: #{tpu_custom_call.1} parent=1 // pred_region
      %s1818 = ssub.s32 4096, 4096
      %1819 = vsyncadd [#allocation3], %s1818
      %s1820 = sshll.u32 [#allocation2], 4
      %s1821 = int_to_ptr.vmem [resolvable:$true] %s1820
      %1826 = dma.vmem_to_hbm [thread:$0]  %s1821, 4096, %s5, [#allocation3], 128, 128, 8
    $region25: #{tpu_custom_call.1} parent=1 // pred_fallthru
      _
    // Predicated region
    $region26: #{tpu_custom_call.1} parent=1 // pred_check
      _
    $region27: #{tpu_custom_call.1} parent=1 // pred_check_branch
      %1828 = sbr.rel (0) target = $region29
    $region28: #{tpu_custom_call.1} parent=1 // pred_region
      %1829 = dma.done [#allocation3], 4096
    $region29: #{tpu_custom_call.1} parent=1 // pred_fallthru
      _
    %1830 = vsyncpa [#allocation3], 1

</llo_original>
